<compile_context>
chip_gen: v7x
topology: tpu7x:2x2x1
jax: 0.10.0
libtpu: 0.0.40
codegen_flags: <defaults>
</compile_context>

<pallas_src>
import functools

import jax
import jax.numpy as jnp
from jax.experimental import pallas as pl
from jax.experimental.pallas import tpu as pltpu

STRD = {'down_temp': (2, 1, 1), 'down_spat': (1, 2, 2),
        'down_spatemp': (2, 2, 2), 'stable': (1, 1, 1)}

NUM_OUT = [16, 96, 192, 384, 768]
NUM_MID = [96, 192, 384, 768]


def _round_up(x, m):
    return (x + m - 1) // m * m


def _choose_tm(M):
    # row-tile: big enough to amortize per-step overhead, small enough for VMEM on v7x
    return 512 if M >= 512 else _round_up(M, 16)


# ----------------------------- Pallas kernels -----------------------------

def _conv_pro_kernel(a_ref, w_ref, scale_ref, shift_ref, o_ref, acc_ref):
    """out[m] = sum_t relu(A[t, m] * scale + shift) @ W[t]  (BN+ReLU prologue fused)."""
    t = pl.program_id(1)

    @pl.when(t == 0)
    def _():
        acc_ref[...] = jnp.zeros_like(acc_ref)

    a = a_ref[0].astype(jnp.float32)
    a = jnp.maximum(a * scale_ref[...] + shift_ref[...], 0.0)
    acc_ref[...] += jnp.dot(a.astype(jnp.bfloat16), w_ref[0],
                            preferred_element_type=jnp.float32)

    @pl.when(t == pl.num_programs(1) - 1)
    def _():
        o_ref[...] = acc_ref[...].astype(o_ref.dtype)


def _conv_epi_kernel(a_ref, w_ref, scale_ref, shift_ref, o_ref, acc_ref):
    """out[m] = relu((sum_t A[t, m] @ W[t]) * scale + shift)  (BN+ReLU epilogue fused)."""
    t = pl.program_id(1)

    @pl.when(t == 0)
    def _():
        acc_ref[...] = jnp.zeros_like(acc_ref)

    acc_ref[...] += jnp.dot(a_ref[0], w_ref[0], preferred_element_type=jnp.float32)

    @pl.when(t == pl.num_programs(1) - 1)
    def _():
        y = jnp.maximum(acc_ref[...] * scale_ref[...] + shift_ref[...], 0.0)
        o_ref[...] = y.astype(o_ref.dtype)


@functools.lru_cache(maxsize=None)
def _conv_call(mode, taps, Mp, tm, K, Cout):
    kern = _conv_pro_kernel if mode == 'pro' else _conv_epi_kernel
    C = K if mode == 'pro' else Cout
    return pl.pallas_call(
        kern,
        out_shape=jax.ShapeDtypeStruct((Mp, Cout), jnp.float32),
        grid=(Mp // tm, taps),
        in_specs=[pl.BlockSpec((1, tm, K), lambda m, t: (t, m, 0)),
                  pl.BlockSpec((1, K, Cout), lambda m, t: (t, 0, 0)),
                  pl.BlockSpec((1, C), lambda m, t: (0, 0)),
                  pl.BlockSpec((1, C), lambda m, t: (0, 0))],
        out_specs=pl.BlockSpec((tm, Cout), lambda m, t: (m, 0)),
        scratch_shapes=[pltpu.VMEM((tm, Cout), jnp.float32)],
        compiler_params=pltpu.CompilerParams(
            dimension_semantics=("parallel", "arbitrary")),
    )


def _max_kernel(a_ref, o_ref):
    t = pl.program_id(1)

    @pl.when(t == 0)
    def _():
        o_ref[...] = a_ref[0]

    @pl.when(t > 0)
    def _():
        o_ref[...] = jnp.maximum(o_ref[...], a_ref[0])


@functools.lru_cache(maxsize=None)
def _max_call(taps, Mp, tm, C):
    return pl.pallas_call(
        _max_kernel,
        out_shape=jax.ShapeDtypeStruct((Mp, C), jnp.float32),
        grid=(Mp // tm, taps),
        in_specs=[pl.BlockSpec((1, tm, C), lambda m, t: (t, m, 0))],
        out_specs=pl.BlockSpec((tm, C), lambda m, t: (m, 0)),
        compiler_params=pltpu.CompilerParams(
            dimension_semantics=("parallel", "arbitrary")),
    )


def _tail_gap_kernel(x_ref, scale_ref, shift_ref, o_ref):
    # tail BN + ReLU fused with the global average pool (per sample)
    y = jnp.maximum(x_ref[0].astype(jnp.float32) * scale_ref[...] + shift_ref[...], 0.0)
    o_ref[0] = jnp.mean(y, axis=0, keepdims=True)


@functools.lru_cache(maxsize=None)
def _tail_gap_call(N, M, C):
    return pl.pallas_call(
        _tail_gap_kernel,
        out_shape=jax.ShapeDtypeStruct((N, 1, C), jnp.float32),
        grid=(N,),
        in_specs=[pl.BlockSpec((1, M, C), lambda n: (n, 0, 0)),
                  pl.BlockSpec((1, C), lambda n: (0, 0)),
                  pl.BlockSpec((1, C), lambda n: (0, 0))],
        out_specs=pl.BlockSpec((1, 1, C), lambda n: (n, 0, 0)),
        compiler_params=pltpu.CompilerParams(dimension_semantics=("arbitrary",)),
    )


def _linear_kernel(x_ref, w_ref, b_ref, o_ref):
    o_ref[...] = jnp.dot(x_ref[...], w_ref[...],
                         preferred_element_type=jnp.float32) + b_ref[...]


@functools.lru_cache(maxsize=None)
def _linear_call(M, K, N):
    return pl.pallas_call(
        _linear_kernel,
        out_shape=jax.ShapeDtypeStruct((M, N), jnp.float32),
        grid=(1,),
        in_specs=[pl.BlockSpec((M, K), lambda i: (0, 0)),
                  pl.BlockSpec((K, N), lambda i: (0, 0)),
                  pl.BlockSpec((1, N), lambda i: (0, 0))],
        out_specs=pl.BlockSpec((M, N), lambda i: (0, 0)),
    )


# ----------------------------- glue: conv / pool / gap / linear -----------------------------

def _slab_list(xp, kernel, stride, out_dims, C):
    kt, kh, kw = kernel
    st, sh, sw = stride
    To, Ho, Wo = out_dims
    slabs = []
    for a in range(kt):
        for b in range(kh):
            for c in range(kw):
                sl = xp[:, a:a + st * To:st, b:b + sh * Ho:sh, c:c + sw * Wo:sw, :]
                slabs.append(sl.reshape(-1, C))
    return slabs


@functools.partial(jax.jit, static_argnames=('kernel', 'stride', 'pad', 'mode', 'fold_taps'))
def _conv_fwd_jit(x, Wt, scale, shift, padv, *, kernel, stride, pad, mode, fold_taps):
    N, T, H, W, Cin = x.shape
    kt, kh, kw = kernel
    st, sh, sw = stride
    pt, ph, pw = pad
    To = (T + 2 * pt - kt) // st + 1
    Ho = (H + 2 * ph - kh) // sh + 1
    Wo = (W + 2 * pw - kw) // sw + 1
    if pt or ph or pw:
        if mode == 'pro' and padv is not None:
            # BN+ReLU runs inside the kernel, so pad with the per-channel value that
            # maps to 0 after scale/shift+ReLU (preserves the zero-pad conv semantics).
            pv = padv.reshape(1, 1, 1, 1, Cin)
            xp = jnp.pad(x - pv, ((0, 0), (pt, pt), (ph, ph), (pw, pw), (0, 0))) + pv
        else:
            xp = jnp.pad(x, ((0, 0), (pt, pt), (ph, ph), (pw, pw), (0, 0)))
    else:
        xp = x
    xp = xp.astype(jnp.bfloat16)
    M = N * To * Ho * Wo
    slabs = _slab_list(xp, kernel, stride, (To, Ho, Wo), Cin)
    if fold_taps:
        A = jnp.concatenate(slabs, axis=-1)[None]        # (1, M, taps*Cin)
    elif len(slabs) == 1:
        A = slabs[0][None]                               # (1, M, Cin)
    else:
        A = jnp.stack(slabs, axis=0)                     # (taps, M, Cin)
    Kw = Wt.shape[1]
    if A.shape[-1] != Kw:                                # folded K padded to a sublane multiple
        A = jnp.pad(A, ((0, 0), (0, 0), (0, Kw - A.shape[-1])))
    taps = A.shape[0]
    Cout = Wt.shape[-1]
    tm = _choose_tm(M)
    Mp = _round_up(M, tm)
    if Mp != M:
        A = jnp.pad(A, ((0, 0), (0, Mp - M), (0, 0)))
    out = _conv_call(mode, taps, Mp, tm, Kw, Cout)(A, Wt, scale, shift)
    return out[:M].reshape(N, To, Ho, Wo, Cout)


def conv_fwd(p, x):
    return _conv_fwd_jit(x, p['Wt'], p['scale'], p['shift'], p['padv'],
                         kernel=p['kernel'], stride=p['stride'], pad=p['pad'],
                         mode=p['mode'], fold_taps=p['fold_taps'])


@functools.partial(jax.jit, static_argnames=('kernel', 'stride', 'pad'))
def _maxpool_jit(x, *, kernel=(1, 3, 3), stride=(1, 2, 2), pad=(0, 1, 1)):
    N, T, H, W, C = x.shape
    kt, kh, kw = kernel
    st, sh, sw = stride
    pt, ph, pw = pad
    To = (T + 2 * pt - kt) // st + 1
    Ho = (H + 2 * ph - kh) // sh + 1
    Wo = (W + 2 * pw - kw) // sw + 1
    xp = jnp.pad(x, ((0, 0), (pt, pt), (ph, ph), (pw, pw), (0, 0)),
                 constant_values=-jnp.inf)
    M = N * To * Ho * Wo
    A = jnp.stack(_slab_list(xp, kernel, stride, (To, Ho, Wo), C), axis=0)
    tm = _choose_tm(M)
    Mp = _round_up(M, tm)
    if Mp != M:
        A = jnp.pad(A, ((0, 0), (0, Mp - M), (0, 0)))
    out = _max_call(kt * kh * kw, Mp, tm, C)(A)
    return out[:M].reshape(N, To, Ho, Wo, C)


@jax.jit
def _tail_gap_jit(x, scale, shift):
    # TODO(synk): AvgPool3d((8,7,7), stride 1) equals a global mean only at the reference
    # 16x224x224 resolution; implemented as tail BN+ReLU fused with a global average pool.
    N, T, H, W, C = x.shape
    M = T * H * W
    out = _tail_gap_call(N, M, C)(x.reshape(N, M, C), scale, shift)
    return out.reshape(N, C)


@jax.jit
def _linear_jit(x, wt, b):
    M, K = x.shape
    Nc = wt.shape[-1]
    return _linear_call(M, K, Nc)(x, wt, b)


# ----------------------------- parameter construction -----------------------------

class ParamGen:
    def __init__(self, seed=0):
        self._key = jax.random.PRNGKey(seed)

    def next(self):
        self._key, sub = jax.random.split(self._key)
        return sub


def init_conv_w(pg, cout, cin_g, kt, kh, kw):
    fan_in = cin_g * kt * kh * kw
    std = (2.0 / fan_in) ** 0.5
    return std * jax.random.normal(pg.next(), (cout, cin_g, kt, kh, kw), jnp.float32)


def init_bn(c):
    return {'gamma': jnp.ones((c,), jnp.float32), 'beta': jnp.zeros((c,), jnp.float32),
            'mean': jnp.zeros((c,), jnp.float32), 'var': jnp.ones((c,), jnp.float32)}


def _bn_scale_shift(bn, eps=1e-5):
    # TODO(synk): BatchNorm folded in inference mode (running stats), not batch stats.
    scale = bn['gamma'] / jnp.sqrt(bn['var'] + eps)
    shift = bn['beta'] - bn['mean'] * scale
    return scale, shift


def prep_bn(bn):
    scale, shift = _bn_scale_shift(bn)
    C = scale.shape[0]
    return {'scale': scale.reshape(1, C), 'shift': shift.reshape(1, C)}


def prep_conv(w, bn, *, stride, pad, groups=1, mode='pro', fold_taps=False):
    """Precompute per-tap (transposed / block-diag-expanded / bf16) weights + folded BN."""
    assert not (fold_taps and mode == 'pro')
    Cout, Cin_g, kt, kh, kw = w.shape
    taps = kt * kh * kw
    w_t = jnp.transpose(w, (2, 3, 4, 1, 0)).reshape(taps, Cin_g, Cout)
    if groups == 1:
        Wt = w_t
    else:
        # TODO(synk): dense block-diagonal expansion of the grouped weight (exact but wastes
        # MXU flops for large groups); a per-group grid axis would be a further optimization.
        Cout_g = Cout // groups
        w_g = w_t.reshape(taps, Cin_g, groups, Cout_g)
        eye = jnp.eye(groups, dtype=w.dtype)
        Wt = jnp.einsum('tcgo,hg->thcgo', w_g, eye).reshape(taps, Cin_g * groups, Cout)
    if fold_taps:
        Wt = Wt.reshape(1, taps * Wt.shape[1], Cout)
        Kp = _round_up(Wt.shape[1], 16)
        if Kp != Wt.shape[1]:
            Wt = jnp.pad(Wt, ((0, 0), (0, Kp - Wt.shape[1]), (0, 0)))
    Wt = Wt.astype(jnp.bfloat16)
    scale, shift = _bn_scale_shift(bn)
    C = scale.shape[0]
    padv = None
    if mode == 'pro' and any(pp > 0 for pp in pad):
        # per-channel input value that BN+ReLU maps to zero (assumes scale != 0;
        # true for the gamma=1 initialization used here).
        safe = jnp.where(scale != 0, scale, 1.0)
        padv = jnp.where(scale != 0, -shift / safe, 0.0)
    return {'Wt': Wt, 'kernel': (kt, kh, kw), 'stride': tuple(stride), 'pad': tuple(pad),
            'mode': mode, 'fold_taps': fold_taps,
            'scale': scale.reshape(1, C), 'shift': shift.reshape(1, C), 'padv': padv}


def make_mf_unit(pg, num_in, num_mid, num_out, stride, g, first_block):
    num_ix = num_mid // 4

    def bn_ac_conv(cin, cout, kernel=(1, 1, 1), pad=(0, 0, 0), strd=(1, 1, 1), groups=1):
        w = init_conv_w(pg, cout, cin // groups, *kernel)
        return prep_conv(w, init_bn(cin), stride=strd, pad=pad, groups=groups, mode='pro')

    p = {'first': first_block}
    p['conv_i1'] = bn_ac_conv(num_in, num_ix)
    p['conv_i2'] = bn_ac_conv(num_ix, num_in)
    p['conv_m1'] = bn_ac_conv(num_in, num_mid, kernel=(3, 3, 3), pad=(1, 1, 1),
                              strd=stride, groups=g)
    if first_block:
        p['conv_m2'] = bn_ac_conv(num_mid, num_out)
        p['conv_w1'] = bn_ac_conv(num_in, num_out, strd=stride)
    else:
        p['conv_m2'] = bn_ac_conv(num_mid, num_out, kernel=(1, 3, 3), pad=(0, 1, 1), groups=g)
    return p


def mf_unit_fwd(p, x):
    h = conv_fwd(p['conv_i1'], x)
    x_in = x + conv_fwd(p['conv_i2'], h)
    h = conv_fwd(p['conv_m1'], x_in)
    h = conv_fwd(p['conv_m2'], h)
    if p['first']:
        x = conv_fwd(p['conv_w1'], x)
    return h + x


def make_modality_block(pg, mod_name, input_channels, g, k_sec, num_mid, num_out):
    p = {'conv1': prep_conv(init_conv_w(pg, num_out[0], input_channels, 3, 5, 5),
                            init_bn(num_out[0]), stride=STRD['down_spat'], pad=(1, 2, 2),
                            mode='epi', fold_taps=True),
         'blocks': []}
    for block_id, (key, value) in enumerate(k_sec.items()):
        units = []
        for i in range(1, value + 1):
            if i == 1:
                if block_id == 0:
                    stride = STRD['stable'] if mod_name == 'Flow' else STRD['down_temp']
                else:
                    stride = STRD['down_spat']
                num_in = num_out[block_id]
                fb = True
            else:
                stride = STRD['stable']
                num_in = num_out[block_id + 1]
                fb = False
            units.append(make_mf_unit(pg, num_in, num_mid[block_id],
                                      num_out[block_id + 1], stride, g, fb))
        p['blocks'].append(units)
    return p


def modality_block_fwd(p, x):
    h = conv_fwd(p['conv1'], x)   # conv1 + BN + ReLU (epilogue-fused, taps folded into K)
    h = _maxpool_jit(h)           # h1
    outs = [h]
    for units in p['blocks']:     # conv2 .. conv5
        for u in units:
            h = mf_unit_fwd(u, h)
        outs.append(h)
    return outs                   # [h1, h2, h3, h4, h5]


def _fold_input_perm(unit, q):
    """Fold an input-channel shuffle into a first-block MF unit's parameters.

    The original fusion block feeds the unit z[..., perm]; q is the *inverse* permutation
    (extended with identity over the `prev` channels).  Rewiring the parameters this way
    lets us feed the unpermuted z and removes the runtime lane-axis gather."""
    for name in ('conv_i1', 'conv_m1', 'conv_w1'):
        c = unit.get(name)
        if c is None:
            continue
        c['Wt'] = c['Wt'][:, q, :]
        c['scale'] = c['scale'][:, q]
        c['shift'] = c['shift'][:, q]
        if c['padv'] is not None:
            c['padv'] = c['padv'][q]
    # conv_i2's output is summed with the (now unpermuted) unit input before conv_m1,
    # so its output channels must be reordered consistently.
    unit['conv_i2']['Wt'] = unit['conv_i2']['Wt'][:, :, q]


def make_fusion_block(pg, modalities, g, k_sec, conv_num_mid, conv_num_out):
    num_modalities = len(modalities)
    num_blocks = len(k_sec) + 1
    layers = []
    for i in range(1, num_blocks + 1):
        num_in = conv_num_out[i - 1]
        num_mid = conv_num_mid[i - 1] // 2 if i == 1 else conv_num_mid[i - 2]
        num_out = conv_num_out[i - 1]
        reducers = []
        for mod_name in modalities:
            stride = STRD['down_temp'] if (i == 1 and mod_name == 'RGB') else STRD['stable']
            w = init_conv_w(pg, num_in // 2, num_in, 1, 1, 1)
            reducers.append(prep_conv(w, init_bn(num_in), stride=stride, pad=(0, 0, 0),
                                      mode='pro'))
        prev_ch = conv_num_out[i - 2] if i > 1 else 0
        c_num_in = num_in + prev_ch
        # even/odd channel shuffle over the reduced concat (identity over the prev part),
        # folded into the combiner params via its inverse.
        perm = list(range(0, num_in, 2)) + list(range(1, num_in + 1, 2))
        inv = [0] * num_in
        for idx, src in enumerate(perm):
            inv[src] = idx
        q = jnp.array(inv + list(range(num_in, c_num_in)), dtype=jnp.int32)
        combiners = []
        for _ in range(num_modalities - 1):
            stride = STRD['stable'] if (i == 1 or i == num_blocks) else STRD['down_spat']
            unit = make_mf_unit(pg, c_num_in, num_mid, num_out, stride, g, True)
            _fold_input_perm(unit, q)
            combiners.append(unit)
        layers.append({'reducers': reducers, 'combiners': combiners})
    return {'layers': layers, 'num_modalities': num_modalities}


def fusion_block_fwd(p, x):
    assert len(x) == p['num_modalities']
    prev = None
    for i, layer in enumerate(p['layers'], start=1):
        reduced = [conv_fwd(r, x[j][i - 1]) for j, r in enumerate(layer['reducers'])]
        for comb in layer['combiners']:
            parts = reduced if prev is None else reduced + [prev]
            combined = jnp.concatenate(parts, axis=-1)
            prev = mf_unit_fwd(comb, combined)   # channel shuffle already folded into comb
    return prev


def make_mfnet_3d_mo_mm(num_classes, modalities, k_sec, groups, seed=0):
    pg = ParamGen(seed)
    params = {'modalities': list(modalities.keys())}
    for mod_name, in_ch in modalities.items():
        params[mod_name] = make_modality_block(pg, mod_name, in_ch, groups, k_sec,
                                               NUM_MID, NUM_OUT)
        params[mod_name + '_tail'] = prep_bn(init_bn(NUM_OUT[-1]))
    params['Fusion'] = make_fusion_block(pg, list(modalities.keys()), groups, k_sec,
                                         NUM_MID, NUM_OUT)
    params['Fusion_tail'] = prep_bn(init_bn(NUM_OUT[-1]))
    num_modalities = len(modalities)
    feat = (num_modalities + (num_modalities - 1)) * NUM_OUT[-1]
    ncs = num_classes if isinstance(num_classes, (list, tuple)) else [num_classes]
    # TODO(synk): MultitaskClassifiers source not provided; modelled as one Linear head per task.
    heads = []
    for nc in ncs:
        w = (1.0 / feat) ** 0.5 * jax.random.normal(pg.next(), (nc, feat), jnp.float32)
        heads.append({'wt': jnp.transpose(w), 'b': jnp.zeros((1, nc), jnp.float32)})
    params['classifiers'] = heads
    return params


def mfnet_forward(params, data):
    rgb, flow = data                               # PyTorch NCDHW layout
    rgb = jnp.transpose(rgb, (0, 2, 3, 4, 1))      # -> (N, T, H, W, C)
    flow = jnp.transpose(flow, (0, 2, 3, 4, 1))
    x_rgb = modality_block_fwd(params['RGB'], rgb)
    x_flow = modality_block_fwd(params['Flow'], flow)
    x_fusion = fusion_block_fwd(params['Fusion'], [x_rgb, x_flow])
    r = _tail_gap_jit(x_rgb[-1], params['RGB_tail']['scale'], params['RGB_tail']['shift'])
    f = _tail_gap_jit(x_flow[-1], params['Flow_tail']['scale'], params['Flow_tail']['shift'])
    fu = _tail_gap_jit(x_fusion, params['Fusion_tail']['scale'], params['Fusion_tail']['shift'])
    x = jnp.concatenate([r, f, fu], axis=-1)       # (N, 3*768)
    # TODO(synk): dropout not applied (module constructed with dropout=None).
    h_out = [_linear_jit(x, h['wt'], h['b']) for h in params['classifiers']]
    coords, heatmaps, probabilities, objects = None, None, None, None
    return h_out, coords, heatmaps, probabilities, objects


if __name__ == "__main__":
    key = jax.random.PRNGKey(0)
    k1, k2 = jax.random.split(key)
    # Small shape-consistent inputs: RGB has 2x the temporal length of Flow so the fusion
    # block concatenations line up (mirrors the 16-frame RGB / 8-frame Flow setup).
    rgb = jax.random.normal(k1, (2, 3, 8, 32, 32), jnp.float32)
    flow = jax.random.normal(k2, (2, 2, 4, 32, 32), jnp.float32)
    k_sec = {2: 2, 3: 1, 4: 1, 5: 1}   # small k_sec (module kwarg) to keep the demo light
    params = make_mfnet_3d_mo_mm(num_classes=[5, 7],
                                 modalities={'RGB': 3, 'Flow': 2},
                                 k_sec=k_sec, groups=16, seed=0)
    h_out, coords, heatmaps, probabilities, objects = mfnet_forward(params, (rgb, flow))
    for h in h_out:
        jax.block_until_ready(h)
    assert h_out[0].shape == (2, 5) and h_out[1].shape == (2, 7)
    assert all(bool(jnp.all(jnp.isfinite(h))) for h in h_out)
    print("KERNEL_OK")
</pallas_src>

<mosaic_0001>
module attributes {stable_mosaic.version = 11 : i64} {
  func.func @_conv_epi_kernel(%arg0: i32, %arg1: i32, %arg2: memref<1x512x240xbf16, #tpu.memory_space<vmem>>, %arg3: memref<1x240x16xbf16, #tpu.memory_space<vmem>>, %arg4: memref<1x16xf32, #tpu.memory_space<vmem>>, %arg5: memref<1x16xf32, #tpu.memory_space<vmem>>, %arg6: memref<512x16xf32, #tpu.memory_space<vmem>>, %arg7: memref<512x16xf32, #tpu.memory_space<vmem>>) attributes {dimension_semantics = [#tpu.dimension_semantics<parallel>, #tpu.dimension_semantics<arbitrary>], iteration_bounds = array<i64: 8, 1>, scalar_prefetch = 0 : i64, scratch_operands = 1 : i64, tpu.core_type = #tpu.core_type<tc>, window_params = [{transform_indices = @transform_0, window_bounds = array<i64: 1, 512, 240>}, {transform_indices = @transform_1, window_bounds = array<i64: 1, 240, 16>}, {pipeline_mode = #tpu.pipeline_mode<synchronous>, transform_indices = @transform_2, window_bounds = array<i64: 1, 16>}, {pipeline_mode = #tpu.pipeline_mode<synchronous>, transform_indices = @transform_3, window_bounds = array<i64: 1, 16>}, {transform_indices = @transform_4, window_bounds = array<i64: 512, 16>}]} {
    %c0_i32 = arith.constant 0 : i32
    %0 = arith.cmpi eq, %arg1, %c0_i32 : i32
    %1 = arith.extui %0 : i1 to i32
    %c0_i32_0 = arith.constant 0 : i32
    %2 = arith.cmpi ne, %1, %c0_i32_0 : i32
    scf.if %2 {
      %cst_12 = arith.constant 0.000000e+00 : f32
      %14 = vector.broadcast %cst_12 : f32 to vector<512x16xf32>
      %c0_13 = arith.constant 0 : index
      %c0_14 = arith.constant 0 : index
      %15 = vector.load %arg7[%c0_13, %c0_14] : memref<512x16xf32, #tpu.memory_space<vmem>>, vector<512x16xf32>
      tpu.vector_store %arg7[%c0_13, %c0_14], %14 {strides = array<i32>} : memref<512x16xf32, #tpu.memory_space<vmem>>, vector<512x16xf32>,
    } else {
    }
    %c0 = arith.constant 0 : index
    %c0_1 = arith.constant 0 : index
    %3 = vector.load %arg7[%c0, %c0_1] : memref<512x16xf32, #tpu.memory_space<vmem>>, vector<512x16xf32>
    %c0_2 = arith.constant 0 : index
    %c0_3 = arith.constant 0 : index
    %c0_4 = arith.constant 0 : index
    %4 = vector.load %arg2[%c0_2, %c0_3, %c0_4] : memref<1x512x240xbf16, #tpu.memory_space<vmem>>, vector<1x512x240xbf16>
    %5 = vector.shape_cast %4 : vector<1x512x240xbf16> to vector<512x240xbf16>
    %c0_5 = arith.constant 0 : index
    %c0_6 = arith.constant 0 : index
    %c0_7 = arith.constant 0 : index
    %6 = vector.load %arg3[%c0_5, %c0_6, %c0_7] : memref<1x240x16xbf16, #tpu.memory_space<vmem>>, vector<1x240x16xbf16>
    %7 = vector.shape_cast %6 : vector<1x240x16xbf16> to vector<240x16xbf16>
    %cst = arith.constant dense<0.000000e+00> : vector<512x16xf32>
    %8 = tpu.matmul %5, %7, %cst {dimension_numbers = #tpu.dot_dimension_numbers<[1], [0], [0], [1], [0, 0, 1, 1], [], []>} : vector<512x240xbf16>, vector<240x16xbf16>, vector<512x16xf32> -> vector<512x16xf32>
    %9 = arith.addf %3, %8 : vector<512x16xf32>
    %c0_8 = arith.constant 0 : index
    %c0_9 = arith.constant 0 : index
    %10 = vector.load %arg7[%c0_8, %c0_9] : memref<512x16xf32, #tpu.memory_space<vmem>>, vector<512x16xf32>
    tpu.vector_store %arg7[%c0_8, %c0_9], %9 {strides = array<i32>} : memref<512x16xf32, #tpu.memory_space<vmem>>, vector<512x16xf32>,
    %c0_i32_10 = arith.constant 0 : i32
    %11 = arith.cmpi eq, %arg1, %c0_i32_10 : i32
    %12 = arith.extui %11 : i1 to i32
    %c0_i32_11 = arith.constant 0 : i32
    %13 = arith.cmpi ne, %12, %c0_i32_11 : i32
    scf.if %13 {
      %c0_12 = arith.constant 0 : index
      %c0_13 = arith.constant 0 : index
      %14 = vector.load %arg7[%c0_12, %c0_13] : memref<512x16xf32, #tpu.memory_space<vmem>>, vector<512x16xf32>
      %c0_14 = arith.constant 0 : index
      %c0_15 = arith.constant 0 : index
      %15 = vector.load %arg4[%c0_14, %c0_15] : memref<1x16xf32, #tpu.memory_space<vmem>>, vector<1x16xf32>
      %16 = vector.broadcast %15 : vector<1x16xf32> to vector<512x16xf32>
      %17 = arith.mulf %14, %16 : vector<512x16xf32>
      %c0_16 = arith.constant 0 : index
      %c0_17 = arith.constant 0 : index
      %18 = vector.load %arg5[%c0_16, %c0_17] : memref<1x16xf32, #tpu.memory_space<vmem>>, vector<1x16xf32>
      %19 = vector.broadcast %18 : vector<1x16xf32> to vector<512x16xf32>
      %20 = arith.addf %17, %19 : vector<512x16xf32>
      %cst_18 = arith.constant 0.000000e+00 : f32
      %21 = vector.broadcast %cst_18 : f32 to vector<512x16xf32>
      %22 = arith.maximumf %20, %21 : vector<512x16xf32>
      %c0_19 = arith.constant 0 : index
      %c0_20 = arith.constant 0 : index
      %23 = vector.load %arg6[%c0_19, %c0_20] : memref<512x16xf32, #tpu.memory_space<vmem>>, vector<512x16xf32>
      tpu.vector_store %arg6[%c0_19, %c0_20], %22 {strides = array<i32>} : memref<512x16xf32, #tpu.memory_space<vmem>>, vector<512x16xf32>,
    } else {
    }
    return
  }
  func.func @transform_0(%arg0: i32, %arg1: i32) -> (i32, i32, i32) {
    %c0_i32 = arith.constant 0 : i32
    %c0_i32_0 = arith.constant 0 : i32
    return %arg1, %arg0, %c0_i32 : i32, i32, i32
  }
  func.func @transform_1(%arg0: i32, %arg1: i32) -> (i32, i32, i32) {
    %c0_i32 = arith.constant 0 : i32
    %c0_i32_0 = arith.constant 0 : i32
    %c0_i32_1 = arith.constant 0 : i32
    return %arg1, %c0_i32, %c0_i32_0 : i32, i32, i32
  }
  func.func @transform_2(%arg0: i32, %arg1: i32) -> (i32, i32) {
    %c0_i32 = arith.constant 0 : i32
    %c0_i32_0 = arith.constant 0 : i32
    %c0_i32_1 = arith.constant 0 : i32
    return %c0_i32, %c0_i32_0 : i32, i32
  }
  func.func @transform_3(%arg0: i32, %arg1: i32) -> (i32, i32) {
    %c0_i32 = arith.constant 0 : i32
    %c0_i32_0 = arith.constant 0 : i32
    %c0_i32_1 = arith.constant 0 : i32
    return %c0_i32, %c0_i32_0 : i32, i32
  }
  func.func @transform_4(%arg0: i32, %arg1: i32) -> (i32, i32) {
    %c0_i32 = arith.constant 0 : i32
    %c0_i32_0 = arith.constant 0 : i32
    return %arg0, %c0_i32 : i32, i32
  }
}

</mosaic_0001>

<llo_original>
// kernel: _conv_fwd_jit.1
$region0: #{_conv_fwd_jit.1}
  #allocation0 [shape = 'u32[]', space=smem, size = 0x4, offset = 0x4, fixed_abs, tag = 'smem constant byte address 0x4 - core index']
  #allocation1 [shape = 'u32[144,128]{1,0:T(1,128)}', space=vmem, size = 0x12000, scoped, tag = 'internal scratch']
  #allocation2 [shape = 'f32[512,16]{1,0:T(8,128)}', space=vmem, size = 0x40000, scoped, tag = 'scratch operand']
  %s0 = inlined_call_operand.vmem [shape: bf16[1,4096,240], index: 0, kind: input, shape index: {}]
  %s1 = inlined_call_operand.vmem [shape: bf16[1,240,16], index: 1, kind: input, shape index: {}]
  %s2 = inlined_call_operand.vmem [shape: f32[1,16], index: 2, kind: input, shape index: {}]
  %s3 = inlined_call_operand.vmem [shape: f32[1,16], index: 3, kind: input, shape index: {}]
  %s4 = inlined_call_operand.hbm [shape: f32[4096,16], index: 4, kind: output, shape index: {}]
  %s5 = sld [smem:[#allocation0]]
  $region57: #{_conv_fwd_jit.1} parent=0
    _
  %s7 = ssub.s32 1, %s5
  %s8 = scalar_select 0, %s7, %s5
  $region1: #{_conv_fwd_jit.1} parent=0
    #allocation3 [shape = 'u8[524288]{0}', space=vmem, size = 0x80000, scoped, tag = 'output window, operand 0']
    #allocation4 [shape = 's32[2]{0}', space=sflag, size = 0x8, scoped, tag = 'scoped memory for _conv_fwd_jit.1']
    %9 = vsyncpa [#allocation4], 0
    %s10 = scalar_lea.sflag [#allocation4], 1
    %11 = vsyncpa %s10, 0
    loop: start=0, step=1, limit=10
    $region2: #{_conv_fwd_jit.1} parent=1 // loop_pre_header
      _
    $region3: #{_conv_fwd_jit.1} parent=1 // loop_header
      %s13 = sphi 0, %s17
      %p14 = scmp.ge.s32.totalorder %s13, 10
      %s20 = sphi 0, %s32
      %s21 = sphi 0, %s28
      %s22 = sphi 0, %s20
      %s23 = sphi 0, %s21
      %s24 = sphi 0, %s22
      %s25 = sphi 0, %s23
      %s37 = sphi 0, %s39
      %s40 = sphi 0, %s37
      %s41 = sphi 0, %s40
      %s57 = sphi 0, %s41
      %s63 = sphi 0, %s65
      %s66 = sphi 0, %s63
      %s67 = sphi 0, %s66
      %s83 = sphi 0, %s67
      %s87 = sphi 0, %s87
      %s89 = sphi 0, %s87
      %s90 = sphi 0, %s89
      %s104 = sphi 0, %s90
      %s108 = sphi 0, %s108
      %s110 = sphi 0, %s108
      %s111 = sphi 0, %s110
      %s125 = sphi 0, %s111
      %s131 = sphi 0, %s133
      %s134 = sphi 0, %s131
      %s135 = sphi 0, %s134
      %s151 = sphi 0, %s135
    $region4: #{_conv_fwd_jit.1} parent=1 // loop_header_branch
      %16 = sbr.rel (%p14) target = $region8
    $region5: #{_conv_fwd_jit.1} parent=1 // loop_body
      %s18 = ssub.s32 %s13, 1
      %s19 = ssub.s32 %s13, 2
      %s26 = sadd.s32 1, %s21
      %p27 = scmp.ge.s32.totalorder %s26, 1
      %s28 = scalar_select %p27, 0, %s26
      %s29 = sadd.s32 1, %s20
      %s30 = scalar_select %p27, %s29, %s20
      %p31 = scmp.ge.s32.totalorder %s30, 8
      %s32 = scalar_select %p31, 0, %s30
      %s33 = ssub.s32 %s21, %s28
      %s34 = ssub.s32 %s20, %s32
      %s35 = sor.u32 %s33, %s34
      %p36 = scmp.eq.s32.totalorder %s35, 0
      %s38 = sadd.s32 %s37, 1
      %s39 = scalar_select %p36, %s37, %s38
      %p42 = pneg %p36
      %p43 = scmp.eq.s32.totalorder %s13, 7
      %p44 = por %p42, %p43
      %p45 = scmp.ne.s32.totalorder %s37, %s40
      %p46 = scmp.eq.s32.totalorder %s13, 0
      %p47 = por %p45, %p46
      %p48 = scmp.ne.s32.totalorder %s37, %s40
      %p49 = scmp.eq.s32.totalorder %s18, 7
      %p50 = por %p48, %p49
      %p51 = scmp.ne.s32.totalorder %s40, %s41
      %p52 = scmp.eq.s32.totalorder %s18, 0
      %p53 = por %p51, %p52
      %p54 = scmp.ne.s32.totalorder %s40, %s41
      %p55 = scmp.eq.s32.totalorder %s19, 7
      %p56 = por %p54, %p55
      %p58 = scmp.ne.s32.totalorder %s41, %s57
      %p59 = scmp.eq.s32.totalorder %s19, 0
      %p60 = por %p58, %p59
      %s61 = ssub.s32 %s21, %s28
      %p62 = scmp.eq.s32.totalorder %s61, 0
      %s64 = sadd.s32 %s63, 1
      %s65 = scalar_select %p62, %s63, %s64
      %p68 = pneg %p62
      %p69 = scmp.eq.s32.totalorder %s13, 7
      %p70 = por %p68, %p69
      %p71 = scmp.ne.s32.totalorder %s63, %s66
      %p72 = scmp.eq.s32.totalorder %s13, 0
      %p73 = por %p71, %p72
      %p74 = scmp.ne.s32.totalorder %s63, %s66
      %p75 = scmp.eq.s32.totalorder %s18, 7
      %p76 = por %p74, %p75
      %p77 = scmp.ne.s32.totalorder %s66, %s67
      %p78 = scmp.eq.s32.totalorder %s18, 0
      %p79 = por %p77, %p78
      %p80 = scmp.ne.s32.totalorder %s66, %s67
      %p81 = scmp.eq.s32.totalorder %s19, 7
      %p82 = por %p80, %p81
      %p84 = scmp.ne.s32.totalorder %s67, %s83
      %p85 = scmp.eq.s32.totalorder %s19, 0
      %p86 = por %p84, %p85
      %s88 = sadd.s32 %s87, 1
      %p91 = scmp.eq.s32.totalorder %s13, 7
      %p92 = scmp.ne.s32.totalorder %s87, %s89
      %p93 = scmp.eq.s32.totalorder %s13, 0
      %p94 = por %p92, %p93
      %p95 = scmp.ne.s32.totalorder %s87, %s89
      %p96 = scmp.eq.s32.totalorder %s18, 7
      %p97 = por %p95, %p96
      %p98 = scmp.ne.s32.totalorder %s89, %s90
      %p99 = scmp.eq.s32.totalorder %s18, 0
      %p100 = por %p98, %p99
      %p101 = scmp.ne.s32.totalorder %s89, %s90
      %p102 = scmp.eq.s32.totalorder %s19, 7
      %p103 = por %p101, %p102
      %p105 = scmp.ne.s32.totalorder %s90, %s104
      %p106 = scmp.eq.s32.totalorder %s19, 0
      %p107 = por %p105, %p106
      %s109 = sadd.s32 %s108, 1
      %p112 = scmp.eq.s32.totalorder %s13, 7
      %p113 = scmp.ne.s32.totalorder %s108, %s110
      %p114 = scmp.eq.s32.totalorder %s13, 0
      %p115 = por %p113, %p114
      %p116 = scmp.ne.s32.totalorder %s108, %s110
      %p117 = scmp.eq.s32.totalorder %s18, 7
      %p118 = por %p116, %p117
      %p119 = scmp.ne.s32.totalorder %s110, %s111
      %p120 = scmp.eq.s32.totalorder %s18, 0
      %p121 = por %p119, %p120
      %p122 = scmp.ne.s32.totalorder %s110, %s111
      %p123 = scmp.eq.s32.totalorder %s19, 7
      %p124 = por %p122, %p123
      %p126 = scmp.ne.s32.totalorder %s111, %s125
      %p127 = scmp.eq.s32.totalorder %s19, 0
      %p128 = por %p126, %p127
      %s129 = ssub.s32 %s20, %s32
      %p130 = scmp.eq.s32.totalorder %s129, 0
      %s132 = sadd.s32 %s131, 1
      %s133 = scalar_select %p130, %s131, %s132
      %p136 = pneg %p130
      %p137 = scmp.eq.s32.totalorder %s13, 7
      %p138 = por %p136, %p137
      %p139 = scmp.ne.s32.totalorder %s131, %s134
      %p140 = scmp.eq.s32.totalorder %s13, 0
      %p141 = por %p139, %p140
      %p142 = scmp.ne.s32.totalorder %s131, %s134
      %p143 = scmp.eq.s32.totalorder %s18, 7
      %p144 = por %p142, %p143
      %p145 = scmp.ne.s32.totalorder %s134, %s135
      %p146 = scmp.eq.s32.totalorder %s18, 0
      %p147 = por %p145, %p146
      %p148 = scmp.ne.s32.totalorder %s134, %s135
      %p149 = scmp.eq.s32.totalorder %s19, 7
      %p150 = por %p148, %p149
      %p152 = scmp.ne.s32.totalorder %s135, %s151
      %p153 = scmp.eq.s32.totalorder %s19, 0
      %p154 = por %p152, %p153
      %p155 = scmp.le.s32.totalorder 1, %s13
      %p156 = scmp.lt.s32.totalorder %s13, 9
      %p157 = pnand %p155, %p156
      %p158 = pneg %p157
      // Predicated region
      $region9: #{_conv_fwd_jit.1} parent=5 // pred_check
        _
      $region10: #{_conv_fwd_jit.1} parent=5 // pred_check_branch
        %160 = sbr.rel (%p157) target = $region12
      $region11: #{_conv_fwd_jit.1} parent=5 // pred_region
        %s161 = ssub.s32 %s13, 1
        // Predicated region
        $region13: #{_conv_fwd_jit.1} parent=11 // pred_check
          %p162 = pneg %p79
        $region14: #{_conv_fwd_jit.1} parent=11 // pred_check_branch
          %164 = sbr.rel (%p162) target = $region16
        $region15: #{_conv_fwd_jit.1} parent=11 // pred_region
          %p165 = scmp.lt.s32.totalorder %s23, 0
          %s166 = scalar_select %p165, %s23, 0
          %s167 = smul.addr %s166, 30
          %s168 = smul.addr %s167, 4
          %s169 = scalar_lea.vmem %s1, %s168
        $region16: #{_conv_fwd_jit.1} parent=11 // pred_fallthru
          _
        // Predicated region
        $region17: #{_conv_fwd_jit.1} parent=11 // pred_check
          %p170 = pneg %p100
        $region18: #{_conv_fwd_jit.1} parent=11 // pred_check_branch
          %172 = sbr.rel (%p170) target = $region20
        $region19: #{_conv_fwd_jit.1} parent=11 // pred_region
          _
        $region20: #{_conv_fwd_jit.1} parent=11 // pred_fallthru
          _
        // Predicated region
        $region21: #{_conv_fwd_jit.1} parent=11 // pred_check
          %p173 = pneg %p121
        $region22: #{_conv_fwd_jit.1} parent=11 // pred_check_branch
          %175 = sbr.rel (%p173) target = $region24
        $region23: #{_conv_fwd_jit.1} parent=11 // pred_region
          _
        $region24: #{_conv_fwd_jit.1} parent=11 // pred_fallthru
          _
      $region12: #{_conv_fwd_jit.1} parent=5 // pred_fallthru
        _
      %p176 = scmp.lt.s32.totalorder %s13, 8
      // Predicated region
      $region25: #{_conv_fwd_jit.1} parent=5 // pred_check
        %p177 = pneg %p176
      $region26: #{_conv_fwd_jit.1} parent=5 // pred_check_branch
        %179 = sbr.rel (%p177) target = $region28
      $region27: #{_conv_fwd_jit.1} parent=5 // pred_region
        // Predicated region
        $region29: #{_conv_fwd_jit.1} parent=27 // pred_check
          %p180 = pneg %p47
        $region30: #{_conv_fwd_jit.1} parent=27 // pred_check_branch
          %182 = sbr.rel (%p180) target = $region32
        $region31: #{_conv_fwd_jit.1} parent=27 // pred_region
          %s183 = smul.u32 64, %s20
          %p184 = scmp.lt.s32.totalorder %s21, 0
          %s185 = scalar_select %p184, %s21, 0
          %p186 = scmp.lt.s32.totalorder %s183, 511
          %s187 = scalar_select %p186, %s183, 511
          %s188 = smul.addr %s187, 2
          %s189 = smul.addr %s185, 1024
          %s190 = sadd.s32 %s188, %s189
          %s191 = smul.addr %s190, 4
          %s192 = scalar_lea.vmem %s0, %s191
          %s193 = smul.u32 64, %s20
        $region32: #{_conv_fwd_jit.1} parent=27 // pred_fallthru
          _
      $region28: #{_conv_fwd_jit.1} parent=5 // pred_fallthru
        _
      %p194 = scmp.le.s32.totalorder 1, %s13
      %p195 = scmp.lt.s32.totalorder %s13, 9
      %p196 = pnand %p194, %p195
      %p197 = pneg %p196
      // Predicated region
      $region33: #{_conv_fwd_jit.1} parent=5 // pred_check
        _
      $region34: #{_conv_fwd_jit.1} parent=5 // pred_check_branch
        %199 = sbr.rel (%p196) target = $region36
      $region35: #{_conv_fwd_jit.1} parent=5 // pred_region
        %s200 = ssub.s32 %s13, 1
        %s201 = smul.u32 64, %s22
        %p202 = scmp.lt.s32.totalorder %s23, 0
        %s203 = scalar_select %p202, %s23, 0
        %p204 = scmp.lt.s32.totalorder %s201, 511
        %s205 = scalar_select %p204, %s201, 511
        %s206 = smul.addr %s205, 2
        %s207 = smul.addr %s203, 1024
        %s208 = sadd.s32 %s206, %s207
        %s209 = smul.addr %s208, 4
        %s210 = scalar_lea.vmem %s0, %s209
        %p211 = pneg %p53
        %p212 = pneg %p50
        %p213 = scmp.lt.s32.totalorder %s23, 0
        %s214 = scalar_select %p213, %s23, 0
        %s215 = smul.addr %s214, 30
        %s216 = smul.addr %s215, 4
        %s217 = scalar_lea.vmem %s1, %s216
        %p218 = pneg %p79
        %p219 = pneg %p76
        %p220 = pneg %p100
        %p221 = pneg %p97
        %p222 = pneg %p121
        %p223 = pneg %p118
        %p224 = pneg %p147
        %p225 = pneg %p144
        %s226 = sand.u32 %s134, 1
        %s227 = scalar_lea.sflag [#allocation4], %s226
        %s228 = sand.u32 %s134, 1
        %s229 = smul.addr %s228, 512
        %s230 = scalar_lea.vmem [#allocation3], %s229
        %s231 = smul.u32 64, %s22
        %p232 = scmp.lt.s32.totalorder %s23, 0
        %s233 = scalar_select %p232, %s23, 0
        %p234 = scmp.lt.s32.totalorder %s231, 511
        %s235 = scalar_select %p234, %s231, 511
        %s236 = smul.addr %s235, 2
        %s237 = smul.addr %s233, 1024
        %s238 = sadd.s32 %s236, %s237
        %s239 = smul.addr %s238, 4
        %s240 = scalar_lea.vmem %s0, %s239
        %s241 = smul.u32 64, %s22
        %p242 = scmp.lt.s32.totalorder %s23, 0
        %s243 = scalar_select %p242, %s23, 0
        %s244 = smul.addr %s243, 30
        %s245 = smul.addr %s244, 4
        %s246 = scalar_lea.vmem %s1, %s245
        %s247 = smul.u32 64, %s22
        %p249 = scmp.eq.s32.totalorder %s23, 0
        // Predicated region
        $region37: #{_conv_fwd_jit.1} parent=35 // pred_check
          %p250 = pneg %p249
        $region38: #{_conv_fwd_jit.1} parent=35 // pred_check_branch
          %252 = sbr.rel (%p250) target = $region40
        $region39: #{_conv_fwd_jit.1} parent=35 // pred_region
          %vm253 = vcmask 130048
          %254 = vst.msk [vmem:[#allocation2] sm:$0xff] %vm253, 0.0
          %255 = vst.msk [vmem:[#allocation2 + $0x8] sm:$0xff] %vm253, 0.0
          %256 = vst.msk [vmem:[#allocation2 + $0x10] sm:$0xff] %vm253, 0.0
          %257 = vst.msk [vmem:[#allocation2 + $0x18] sm:$0xff] %vm253, 0.0
          %258 = vst.msk [vmem:[#allocation2 + $0x20] sm:$0xff] %vm253, 0.0
          %259 = vst.msk [vmem:[#allocation2 + $0x28] sm:$0xff] %vm253, 0.0
          %260 = vst.msk [vmem:[#allocation2 + $0x30] sm:$0xff] %vm253, 0.0
          %261 = vst.msk [vmem:[#allocation2 + $0x38] sm:$0xff] %vm253, 0.0
          %262 = vst.msk [vmem:[#allocation2 + $0x40] sm:$0xff] %vm253, 0.0
          %263 = vst.msk [vmem:[#allocation2 + $0x48] sm:$0xff] %vm253, 0.0
          %264 = vst.msk [vmem:[#allocation2 + $0x50] sm:$0xff] %vm253, 0.0
          %265 = vst.msk [vmem:[#allocation2 + $0x58] sm:$0xff] %vm253, 0.0
          %266 = vst.msk [vmem:[#allocation2 + $0x60] sm:$0xff] %vm253, 0.0
          %267 = vst.msk [vmem:[#allocation2 + $0x68] sm:$0xff] %vm253, 0.0
          %268 = vst.msk [vmem:[#allocation2 + $0x70] sm:$0xff] %vm253, 0.0
          %269 = vst.msk [vmem:[#allocation2 + $0x78] sm:$0xff] %vm253, 0.0
          %270 = vst.msk [vmem:[#allocation2 + $0x80] sm:$0xff] %vm253, 0.0
          %271 = vst.msk [vmem:[#allocation2 + $0x88] sm:$0xff] %vm253, 0.0
          %272 = vst.msk [vmem:[#allocation2 + $0x90] sm:$0xff] %vm253, 0.0
          %273 = vst.msk [vmem:[#allocation2 + $0x98] sm:$0xff] %vm253, 0.0
          %274 = vst.msk [vmem:[#allocation2 + $0xa0] sm:$0xff] %vm253, 0.0
          %275 = vst.msk [vmem:[#allocation2 + $0xa8] sm:$0xff] %vm253, 0.0
          %276 = vst.msk [vmem:[#allocation2 + $0xb0] sm:$0xff] %vm253, 0.0
          %277 = vst.msk [vmem:[#allocation2 + $0xb8] sm:$0xff] %vm253, 0.0
          %278 = vst.msk [vmem:[#allocation2 + $0xc0] sm:$0xff] %vm253, 0.0
          %279 = vst.msk [vmem:[#allocation2 + $0xc8] sm:$0xff] %vm253, 0.0
          %280 = vst.msk [vmem:[#allocation2 + $0xd0] sm:$0xff] %vm253, 0.0
          %281 = vst.msk [vmem:[#allocation2 + $0xd8] sm:$0xff] %vm253, 0.0
          %282 = vst.msk [vmem:[#allocation2 + $0xe0] sm:$0xff] %vm253, 0.0
          %283 = vst.msk [vmem:[#allocation2 + $0xe8] sm:$0xff] %vm253, 0.0
          %284 = vst.msk [vmem:[#allocation2 + $0xf0] sm:$0xff] %vm253, 0.0
          %285 = vst.msk [vmem:[#allocation2 + $0xf8] sm:$0xff] %vm253, 0.0
          %286 = vst.msk [vmem:[#allocation2 + $0x100] sm:$0xff] %vm253, 0.0
          %287 = vst.msk [vmem:[#allocation2 + $0x108] sm:$0xff] %vm253, 0.0
          %288 = vst.msk [vmem:[#allocation2 + $0x110] sm:$0xff] %vm253, 0.0
          %289 = vst.msk [vmem:[#allocation2 + $0x118] sm:$0xff] %vm253, 0.0
          %290 = vst.msk [vmem:[#allocation2 + $0x120] sm:$0xff] %vm253, 0.0
          %291 = vst.msk [vmem:[#allocation2 + $0x128] sm:$0xff] %vm253, 0.0
          %292 = vst.msk [vmem:[#allocation2 + $0x130] sm:$0xff] %vm253, 0.0
          %293 = vst.msk [vmem:[#allocation2 + $0x138] sm:$0xff] %vm253, 0.0
          %294 = vst.msk [vmem:[#allocation2 + $0x140] sm:$0xff] %vm253, 0.0
          %295 = vst.msk [vmem:[#allocation2 + $0x148] sm:$0xff] %vm253, 0.0
          %296 = vst.msk [vmem:[#allocation2 + $0x150] sm:$0xff] %vm253, 0.0
          %297 = vst.msk [vmem:[#allocation2 + $0x158] sm:$0xff] %vm253, 0.0
          %298 = vst.msk [vmem:[#allocation2 + $0x160] sm:$0xff] %vm253, 0.0
          %299 = vst.msk [vmem:[#allocation2 + $0x168] sm:$0xff] %vm253, 0.0
          %300 = vst.msk [vmem:[#allocation2 + $0x170] sm:$0xff] %vm253, 0.0
          %301 = vst.msk [vmem:[#allocation2 + $0x178] sm:$0xff] %vm253, 0.0
          %302 = vst.msk [vmem:[#allocation2 + $0x180] sm:$0xff] %vm253, 0.0
          %303 = vst.msk [vmem:[#allocation2 + $0x188] sm:$0xff] %vm253, 0.0
          %304 = vst.msk [vmem:[#allocation2 + $0x190] sm:$0xff] %vm253, 0.0
          %305 = vst.msk [vmem:[#allocation2 + $0x198] sm:$0xff] %vm253, 0.0
          %306 = vst.msk [vmem:[#allocation2 + $0x1a0] sm:$0xff] %vm253, 0.0
          %307 = vst.msk [vmem:[#allocation2 + $0x1a8] sm:$0xff] %vm253, 0.0
          %308 = vst.msk [vmem:[#allocation2 + $0x1b0] sm:$0xff] %vm253, 0.0
          %309 = vst.msk [vmem:[#allocation2 + $0x1b8] sm:$0xff] %vm253, 0.0
          %310 = vst.msk [vmem:[#allocation2 + $0x1c0] sm:$0xff] %vm253, 0.0
          %311 = vst.msk [vmem:[#allocation2 + $0x1c8] sm:$0xff] %vm253, 0.0
          %312 = vst.msk [vmem:[#allocation2 + $0x1d0] sm:$0xff] %vm253, 0.0
          %313 = vst.msk [vmem:[#allocation2 + $0x1d8] sm:$0xff] %vm253, 0.0
          %314 = vst.msk [vmem:[#allocation2 + $0x1e0] sm:$0xff] %vm253, 0.0
          %315 = vst.msk [vmem:[#allocation2 + $0x1e8] sm:$0xff] %vm253, 0.0
          %316 = vst.msk [vmem:[#allocation2 + $0x1f0] sm:$0xff] %vm253, 0.0
          %317 = vst.msk [vmem:[#allocation2 + $0x1f8] sm:$0xff] %vm253, 0.0
        $region40: #{_conv_fwd_jit.1} parent=35 // pred_fallthru
          _
        %v318 = vld [vmem:[#allocation2] sm:$0xff]
        %v319 = vld [vmem:[#allocation2 + $0x8] sm:$0xff]
        %v320 = vld [vmem:[#allocation2 + $0x10] sm:$0xff]
        %v321 = vld [vmem:[#allocation2 + $0x18] sm:$0xff]
        %v322 = vld [vmem:[#allocation2 + $0x20] sm:$0xff]
        %v323 = vld [vmem:[#allocation2 + $0x28] sm:$0xff]
        %v324 = vld [vmem:[#allocation2 + $0x30] sm:$0xff]
        %v325 = vld [vmem:[#allocation2 + $0x38] sm:$0xff]
        %v326 = vld [vmem:[#allocation2 + $0x40] sm:$0xff]
        %v327 = vld [vmem:[#allocation2 + $0x48] sm:$0xff]
        %v328 = vld [vmem:[#allocation2 + $0x50] sm:$0xff]
        %v329 = vld [vmem:[#allocation2 + $0x58] sm:$0xff]
        %v330 = vld [vmem:[#allocation2 + $0x60] sm:$0xff]
        %v331 = vld [vmem:[#allocation2 + $0x68] sm:$0xff]
        %v332 = vld [vmem:[#allocation2 + $0x70] sm:$0xff]
        %v333 = vld [vmem:[#allocation2 + $0x78] sm:$0xff]
        %v334 = vld [vmem:[#allocation2 + $0x80] sm:$0xff]
        %v335 = vld [vmem:[#allocation2 + $0x88] sm:$0xff]
        %v336 = vld [vmem:[#allocation2 + $0x90] sm:$0xff]
        %v337 = vld [vmem:[#allocation2 + $0x98] sm:$0xff]
        %v338 = vld [vmem:[#allocation2 + $0xa0] sm:$0xff]
        %v339 = vld [vmem:[#allocation2 + $0xa8] sm:$0xff]
        %v340 = vld [vmem:[#allocation2 + $0xb0] sm:$0xff]
        %v341 = vld [vmem:[#allocation2 + $0xb8] sm:$0xff]
        %v342 = vld [vmem:[#allocation2 + $0xc0] sm:$0xff]
        %v343 = vld [vmem:[#allocation2 + $0xc8] sm:$0xff]
        %v344 = vld [vmem:[#allocation2 + $0xd0] sm:$0xff]
        %v345 = vld [vmem:[#allocation2 + $0xd8] sm:$0xff]
        %v346 = vld [vmem:[#allocation2 + $0xe0] sm:$0xff]
        %v347 = vld [vmem:[#allocation2 + $0xe8] sm:$0xff]
        %v348 = vld [vmem:[#allocation2 + $0xf0] sm:$0xff]
        %v349 = vld [vmem:[#allocation2 + $0xf8] sm:$0xff]
        %v350 = vld [vmem:[#allocation2 + $0x100] sm:$0xff]
        %v351 = vld [vmem:[#allocation2 + $0x108] sm:$0xff]
        %v352 = vld [vmem:[#allocation2 + $0x110] sm:$0xff]
        %v353 = vld [vmem:[#allocation2 + $0x118] sm:$0xff]
        %v354 = vld [vmem:[#allocation2 + $0x120] sm:$0xff]
        %v355 = vld [vmem:[#allocation2 + $0x128] sm:$0xff]
        %v356 = vld [vmem:[#allocation2 + $0x130] sm:$0xff]
        %v357 = vld [vmem:[#allocation2 + $0x138] sm:$0xff]
        %v358 = vld [vmem:[#allocation2 + $0x140] sm:$0xff]
        %v359 = vld [vmem:[#allocation2 + $0x148] sm:$0xff]
        %v360 = vld [vmem:[#allocation2 + $0x150] sm:$0xff]
        %v361 = vld [vmem:[#allocation2 + $0x158] sm:$0xff]
        %v362 = vld [vmem:[#allocation2 + $0x160] sm:$0xff]
        %v363 = vld [vmem:[#allocation2 + $0x168] sm:$0xff]
        %v364 = vld [vmem:[#allocation2 + $0x170] sm:$0xff]
        %v365 = vld [vmem:[#allocation2 + $0x178] sm:$0xff]
        %v366 = vld [vmem:[#allocation2 + $0x180] sm:$0xff]
        %v367 = vld [vmem:[#allocation2 + $0x188] sm:$0xff]
        %v368 = vld [vmem:[#allocation2 + $0x190] sm:$0xff]
        %v369 = vld [vmem:[#allocation2 + $0x198] sm:$0xff]
        %v370 = vld [vmem:[#allocation2 + $0x1a0] sm:$0xff]
        %v371 = vld [vmem:[#allocation2 + $0x1a8] sm:$0xff]
        %v372 = vld [vmem:[#allocation2 + $0x1b0] sm:$0xff]
        %v373 = vld [vmem:[#allocation2 + $0x1b8] sm:$0xff]
        %v374 = vld [vmem:[#allocation2 + $0x1c0] sm:$0xff]
        %v375 = vld [vmem:[#allocation2 + $0x1c8] sm:$0xff]
        %v376 = vld [vmem:[#allocation2 + $0x1d0] sm:$0xff]
        %v377 = vld [vmem:[#allocation2 + $0x1d8] sm:$0xff]
        %v378 = vld [vmem:[#allocation2 + $0x1e0] sm:$0xff]
        %v379 = vld [vmem:[#allocation2 + $0x1e8] sm:$0xff]
        %v380 = vld [vmem:[#allocation2 + $0x1f0] sm:$0xff]
        %v381 = vld [vmem:[#allocation2 + $0x1f8] sm:$0xff]
        %v382 = vld [vmem:[%s240] sm:$0xff]
        %v383 = vld [vmem:[%s240 + $0x8] sm:$0xff]
        %v384 = vld [vmem:[%s240 + $0x10] sm:$0xff]
        %v385 = vld [vmem:[%s240 + $0x18] sm:$0xff]
        %v386 = vld [vmem:[%s240 + $0x20] sm:$0xff]
        %v387 = vld [vmem:[%s240 + $0x28] sm:$0xff]
        %v388 = vld [vmem:[%s240 + $0x30] sm:$0xff]
        %v389 = vld [vmem:[%s240 + $0x38] sm:$0xff]
        %v390 = vld [vmem:[%s240 + $0x40] sm:$0xff]
        %v391 = vld [vmem:[%s240 + $0x48] sm:$0xff]
        %v392 = vld [vmem:[%s240 + $0x50] sm:$0xff]
        %v393 = vld [vmem:[%s240 + $0x58] sm:$0xff]
        %v394 = vld [vmem:[%s240 + $0x60] sm:$0xff]
        %v395 = vld [vmem:[%s240 + $0x68] sm:$0xff]
        %v396 = vld [vmem:[%s240 + $0x70] sm:$0xff]
        %v397 = vld [vmem:[%s240 + $0x78] sm:$0xff]
        %v398 = vld [vmem:[%s240 + $0x80] sm:$0xff]
        %v399 = vld [vmem:[%s240 + $0x88] sm:$0xff]
        %v400 = vld [vmem:[%s240 + $0x90] sm:$0xff]
        %v401 = vld [vmem:[%s240 + $0x98] sm:$0xff]
        %v402 = vld [vmem:[%s240 + $0xa0] sm:$0xff]
        %v403 = vld [vmem:[%s240 + $0xa8] sm:$0xff]
        %v404 = vld [vmem:[%s240 + $0xb0] sm:$0xff]
        %v405 = vld [vmem:[%s240 + $0xb8] sm:$0xff]
        %v406 = vld [vmem:[%s240 + $0xc0] sm:$0xff]
        %v407 = vld [vmem:[%s240 + $0xc8] sm:$0xff]
        %v408 = vld [vmem:[%s240 + $0xd0] sm:$0xff]
        %v409 = vld [vmem:[%s240 + $0xd8] sm:$0xff]
        %v410 = vld [vmem:[%s240 + $0xe0] sm:$0xff]
        %v411 = vld [vmem:[%s240 + $0xe8] sm:$0xff]
        %v412 = vld [vmem:[%s240 + $0xf0] sm:$0xff]
        %v413 = vld [vmem:[%s240 + $0xf8] sm:$0xff]
        %v414 = vld [vmem:[%s240 + $0x100] sm:$0xff]
        %v415 = vld [vmem:[%s240 + $0x108] sm:$0xff]
        %v416 = vld [vmem:[%s240 + $0x110] sm:$0xff]
        %v417 = vld [vmem:[%s240 + $0x118] sm:$0xff]
        %v418 = vld [vmem:[%s240 + $0x120] sm:$0xff]
        %v419 = vld [vmem:[%s240 + $0x128] sm:$0xff]
        %v420 = vld [vmem:[%s240 + $0x130] sm:$0xff]
        %v421 = vld [vmem:[%s240 + $0x138] sm:$0xff]
        %v422 = vld [vmem:[%s240 + $0x140] sm:$0xff]
        %v423 = vld [vmem:[%s240 + $0x148] sm:$0xff]
        %v424 = vld [vmem:[%s240 + $0x150] sm:$0xff]
        %v425 = vld [vmem:[%s240 + $0x158] sm:$0xff]
        %v426 = vld [vmem:[%s240 + $0x160] sm:$0xff]
        %v427 = vld [vmem:[%s240 + $0x168] sm:$0xff]
        %v428 = vld [vmem:[%s240 + $0x170] sm:$0xff]
        %v429 = vld [vmem:[%s240 + $0x178] sm:$0xff]
        %v430 = vld [vmem:[%s240 + $0x180] sm:$0xff]
        %v431 = vld [vmem:[%s240 + $0x188] sm:$0xff]
        %v432 = vld [vmem:[%s240 + $0x190] sm:$0xff]
        %v433 = vld [vmem:[%s240 + $0x198] sm:$0xff]
        %v434 = vld [vmem:[%s240 + $0x1a0] sm:$0xff]
        %v435 = vld [vmem:[%s240 + $0x1a8] sm:$0xff]
        %v436 = vld [vmem:[%s240 + $0x1b0] sm:$0xff]
        %v437 = vld [vmem:[%s240 + $0x1b8] sm:$0xff]
        %v438 = vld [vmem:[%s240 + $0x1c0] sm:$0xff]
        %v439 = vld [vmem:[%s240 + $0x1c8] sm:$0xff]
        %v440 = vld [vmem:[%s240 + $0x1d0] sm:$0xff]
        %v441 = vld [vmem:[%s240 + $0x1d8] sm:$0xff]
        %v442 = vld [vmem:[%s240 + $0x1e0] sm:$0xff]
        %v443 = vld [vmem:[%s240 + $0x1e8] sm:$0xff]
        %v444 = vld [vmem:[%s240 + $0x1f0] sm:$0xff]
        %v445 = vld [vmem:[%s240 + $0x1f8] sm:$0xff]
        %v446 = vld [vmem:[%s246] sm:$0xf]
        %v447 = vld [vmem:[%s246 + $0x4] sm:$0xf]
        %v448 = vld [vmem:[%s246 + $0x8] sm:$0xf]
        %v449 = vld [vmem:[%s246 + $0xc] sm:$0xf]
        %v450 = vld [vmem:[%s246 + $0x10] sm:$0xf]
        %v451 = vld [vmem:[%s246 + $0x14] sm:$0xf]
        %v452 = vld [vmem:[%s246 + $0x18] sm:$0xf]
        %v453 = vld [vmem:[%s246 + $0x1c] sm:$0xf]
        %v454 = vld [vmem:[%s246 + $0x20] sm:$0xf]
        %v455 = vld [vmem:[%s246 + $0x24] sm:$0xf]
        %v456 = vld [vmem:[%s246 + $0x28] sm:$0xf]
        %v457 = vld [vmem:[%s246 + $0x2c] sm:$0xf]
        %v458 = vld [vmem:[%s246 + $0x30] sm:$0xf]
        %v459 = vld [vmem:[%s246 + $0x34] sm:$0xf]
        %v460 = vld [vmem:[%s246 + $0x38] sm:$0xf]
        %v461 = vld [vmem:[%s246 + $0x3c] sm:$0xf]
        %v462 = vld [vmem:[%s246 + $0x40] sm:$0xf]
        %v463 = vld [vmem:[%s246 + $0x44] sm:$0xf]
        %v464 = vld [vmem:[%s246 + $0x48] sm:$0xf]
        %v465 = vld [vmem:[%s246 + $0x4c] sm:$0xf]
        %v466 = vld [vmem:[%s246 + $0x50] sm:$0xf]
        %v467 = vld [vmem:[%s246 + $0x54] sm:$0xf]
        %v468 = vld [vmem:[%s246 + $0x58] sm:$0xf]
        %v469 = vld [vmem:[%s246 + $0x5c] sm:$0xf]
        %v470 = vld [vmem:[%s246 + $0x60] sm:$0xf]
        %v471 = vld [vmem:[%s246 + $0x64] sm:$0xf]
        %v472 = vld [vmem:[%s246 + $0x68] sm:$0xf]
        %v473 = vld [vmem:[%s246 + $0x6c] sm:$0xf]
        %v474 = vld [vmem:[%s246 + $0x70] sm:$0xf]
        %v475 = vld [vmem:[%s246 + $0x74] sm:$0xf]
        %v540 = vunpack.c.l.b16 %v382
        %v541 = vunpack.c.h.b16 %v382
        %v542 = vunpack.c.l.b16 %v383
        %v543 = vunpack.c.h.b16 %v383
        %v544 = vunpack.c.l.b16 %v384
        %v545 = vunpack.c.h.b16 %v384
        %v546 = vunpack.c.l.b16 %v385
        %v547 = vunpack.c.h.b16 %v385
        %v548 = vunpack.c.l.b16 %v386
        %v549 = vunpack.c.h.b16 %v386
        %v550 = vunpack.c.l.b16 %v387
        %v551 = vunpack.c.h.b16 %v387
        %v552 = vunpack.c.l.b16 %v388
        %v553 = vunpack.c.h.b16 %v388
        %v554 = vunpack.c.l.b16 %v389
        %v555 = vunpack.c.h.b16 %v389
        %v556 = vunpack.c.l.b16 %v390
        %v557 = vunpack.c.h.b16 %v390
        %v558 = vunpack.c.l.b16 %v391
        %v559 = vunpack.c.h.b16 %v391
        %v560 = vunpack.c.l.b16 %v392
        %v561 = vunpack.c.h.b16 %v392
        %v562 = vunpack.c.l.b16 %v393
        %v563 = vunpack.c.h.b16 %v393
        %v564 = vunpack.c.l.b16 %v394
        %v565 = vunpack.c.h.b16 %v394
        %v566 = vunpack.c.l.b16 %v395
        %v567 = vunpack.c.h.b16 %v395
        %v568 = vunpack.c.l.b16 %v396
        %v569 = vunpack.c.h.b16 %v396
        %v570 = vunpack.c.l.b16 %v397
        %v571 = vunpack.c.h.b16 %v397
        %v572 = vunpack.c.l.b16 %v398
        %v573 = vunpack.c.h.b16 %v398
        %v574 = vunpack.c.l.b16 %v399
        %v575 = vunpack.c.h.b16 %v399
        %v576 = vunpack.c.l.b16 %v400
        %v577 = vunpack.c.h.b16 %v400
        %v578 = vunpack.c.l.b16 %v401
        %v579 = vunpack.c.h.b16 %v401
        %v580 = vunpack.c.l.b16 %v402
        %v581 = vunpack.c.h.b16 %v402
        %v582 = vunpack.c.l.b16 %v403
        %v583 = vunpack.c.h.b16 %v403
        %v584 = vunpack.c.l.b16 %v404
        %v585 = vunpack.c.h.b16 %v404
        %v586 = vunpack.c.l.b16 %v405
        %v587 = vunpack.c.h.b16 %v405
        %v588 = vunpack.c.l.b16 %v406
        %v589 = vunpack.c.h.b16 %v406
        %v590 = vunpack.c.l.b16 %v407
        %v591 = vunpack.c.h.b16 %v407
        %v592 = vunpack.c.l.b16 %v408
        %v593 = vunpack.c.h.b16 %v408
        %v594 = vunpack.c.l.b16 %v409
        %v595 = vunpack.c.h.b16 %v409
        %v596 = vunpack.c.l.b16 %v410
        %v597 = vunpack.c.h.b16 %v410
        %v598 = vunpack.c.l.b16 %v411
        %v599 = vunpack.c.h.b16 %v411
        %v600 = vunpack.c.l.b16 %v412
        %v601 = vunpack.c.h.b16 %v412
        %v602 = vunpack.c.l.b16 %v413
        %v603 = vunpack.c.h.b16 %v413
        %v604 = vunpack.c.l.b16 %v414
        %v605 = vunpack.c.h.b16 %v414
        %v606 = vunpack.c.l.b16 %v415
        %v607 = vunpack.c.h.b16 %v415
        %v608 = vunpack.c.l.b16 %v416
        %v609 = vunpack.c.h.b16 %v416
        %v610 = vunpack.c.l.b16 %v417
        %v611 = vunpack.c.h.b16 %v417
        %v612 = vunpack.c.l.b16 %v418
        %v613 = vunpack.c.h.b16 %v418
        %v614 = vunpack.c.l.b16 %v419
        %v615 = vunpack.c.h.b16 %v419
        %v616 = vunpack.c.l.b16 %v420
        %v617 = vunpack.c.h.b16 %v420
        %v618 = vunpack.c.l.b16 %v421
        %v619 = vunpack.c.h.b16 %v421
        %v620 = vunpack.c.l.b16 %v422
        %v621 = vunpack.c.h.b16 %v422
        %v622 = vunpack.c.l.b16 %v423
        %v623 = vunpack.c.h.b16 %v423
        %v624 = vunpack.c.l.b16 %v424
        %v625 = vunpack.c.h.b16 %v424
        %v626 = vunpack.c.l.b16 %v425
        %v627 = vunpack.c.h.b16 %v425
        %v628 = vunpack.c.l.b16 %v426
        %v629 = vunpack.c.h.b16 %v426
        %v630 = vunpack.c.l.b16 %v427
        %v631 = vunpack.c.h.b16 %v427
        %v632 = vunpack.c.l.b16 %v428
        %v633 = vunpack.c.h.b16 %v428
        %v634 = vunpack.c.l.b16 %v429
        %v635 = vunpack.c.h.b16 %v429
        %v636 = vunpack.c.l.b16 %v430
        %v637 = vunpack.c.h.b16 %v430
        %v638 = vunpack.c.l.b16 %v431
        %v639 = vunpack.c.h.b16 %v431
        %v640 = vunpack.c.l.b16 %v432
        %v641 = vunpack.c.h.b16 %v432
        %v642 = vunpack.c.l.b16 %v433
        %v643 = vunpack.c.h.b16 %v433
        %v644 = vunpack.c.l.b16 %v434
        %v645 = vunpack.c.h.b16 %v434
        %v646 = vunpack.c.l.b16 %v435
        %v647 = vunpack.c.h.b16 %v435
        %v648 = vunpack.c.l.b16 %v436
        %v649 = vunpack.c.h.b16 %v436
        %v650 = vunpack.c.l.b16 %v437
        %v651 = vunpack.c.h.b16 %v437
        %v652 = vunpack.c.l.b16 %v438
        %v653 = vunpack.c.h.b16 %v438
        %v654 = vunpack.c.l.b16 %v439
        %v655 = vunpack.c.h.b16 %v439
        %v656 = vunpack.c.l.b16 %v440
        %v657 = vunpack.c.h.b16 %v440
        %v658 = vunpack.c.l.b16 %v441
        %v659 = vunpack.c.h.b16 %v441
        %v660 = vunpack.c.l.b16 %v442
        %v661 = vunpack.c.h.b16 %v442
        %v662 = vunpack.c.l.b16 %v443
        %v663 = vunpack.c.h.b16 %v443
        %v664 = vunpack.c.l.b16 %v444
        %v665 = vunpack.c.h.b16 %v444
        %v666 = vunpack.c.l.b16 %v445
        %v667 = vunpack.c.h.b16 %v445
        %v668 = vpack.c.b16 %v542, %v540
        %v669 = vpack.c.b16 %v543, %v541
        %v670 = vpack.c.b16 %v546, %v544
        %v671 = vpack.c.b16 %v547, %v545
        %v672 = vpack.c.b16 %v550, %v548
        %v673 = vpack.c.b16 %v551, %v549
        %v674 = vpack.c.b16 %v554, %v552
        %v675 = vpack.c.b16 %v555, %v553
        %v676 = vpack.c.b16 %v558, %v556
        %v677 = vpack.c.b16 %v559, %v557
        %v678 = vpack.c.b16 %v562, %v560
        %v679 = vpack.c.b16 %v563, %v561
        %v680 = vpack.c.b16 %v566, %v564
        %v681 = vpack.c.b16 %v567, %v565
        %v682 = vpack.c.b16 %v570, %v568
        %v683 = vpack.c.b16 %v571, %v569
        %v684 = vpack.c.b16 %v574, %v572
        %v685 = vpack.c.b16 %v575, %v573
        %v686 = vpack.c.b16 %v578, %v576
        %v687 = vpack.c.b16 %v579, %v577
        %v688 = vpack.c.b16 %v582, %v580
        %v689 = vpack.c.b16 %v583, %v581
        %v690 = vpack.c.b16 %v586, %v584
        %v691 = vpack.c.b16 %v587, %v585
        %v692 = vpack.c.b16 %v590, %v588
        %v693 = vpack.c.b16 %v591, %v589
        %v694 = vpack.c.b16 %v594, %v592
        %v695 = vpack.c.b16 %v595, %v593
        %v696 = vpack.c.b16 %v598, %v596
        %v697 = vpack.c.b16 %v599, %v597
        %v698 = vpack.c.b16 %v602, %v600
        %v699 = vpack.c.b16 %v603, %v601
        %v700 = vpack.c.b16 %v606, %v604
        %v701 = vpack.c.b16 %v607, %v605
        %v702 = vpack.c.b16 %v610, %v608
        %v703 = vpack.c.b16 %v611, %v609
        %v704 = vpack.c.b16 %v614, %v612
        %v705 = vpack.c.b16 %v615, %v613
        %v706 = vpack.c.b16 %v618, %v616
        %v707 = vpack.c.b16 %v619, %v617
        %v708 = vpack.c.b16 %v622, %v620
        %v709 = vpack.c.b16 %v623, %v621
        %v710 = vpack.c.b16 %v626, %v624
        %v711 = vpack.c.b16 %v627, %v625
        %v712 = vpack.c.b16 %v630, %v628
        %v713 = vpack.c.b16 %v631, %v629
        %v714 = vpack.c.b16 %v634, %v632
        %v715 = vpack.c.b16 %v635, %v633
        %v716 = vpack.c.b16 %v638, %v636
        %v717 = vpack.c.b16 %v639, %v637
        %v718 = vpack.c.b16 %v642, %v640
        %v719 = vpack.c.b16 %v643, %v641
        %v720 = vpack.c.b16 %v646, %v644
        %v721 = vpack.c.b16 %v647, %v645
        %v722 = vpack.c.b16 %v650, %v648
        %v723 = vpack.c.b16 %v651, %v649
        %v724 = vpack.c.b16 %v654, %v652
        %v725 = vpack.c.b16 %v655, %v653
        %v726 = vpack.c.b16 %v658, %v656
        %v727 = vpack.c.b16 %v659, %v657
        %v728 = vpack.c.b16 %v662, %v660
        %v729 = vpack.c.b16 %v663, %v661
        %v730 = vpack.c.b16 %v666, %v664
        %v731 = vpack.c.b16 %v667, %v665
        %v794 = vunpack.c.l.b16 %v446
        %v795 = vunpack.c.l.b16 %v447
        %v796 = vunpack.c.l.b16 %v448
        %v797 = vunpack.c.l.b16 %v449
        %v798 = vunpack.c.l.b16 %v450
        %v799 = vunpack.c.l.b16 %v451
        %v800 = vunpack.c.l.b16 %v452
        %v801 = vunpack.c.l.b16 %v453
        %v802 = vunpack.c.l.b16 %v454
        %v803 = vunpack.c.l.b16 %v455
        %v804 = vunpack.c.l.b16 %v456
        %v805 = vunpack.c.l.b16 %v457
        %v806 = vunpack.c.l.b16 %v458
        %v807 = vunpack.c.l.b16 %v459
        %v808 = vunpack.c.l.b16 %v460
        %v809 = vunpack.c.l.b16 %v461
        %v810 = vunpack.c.l.b16 %v462
        %v811 = vunpack.c.l.b16 %v463
        %v812 = vunpack.c.l.b16 %v464
        %v813 = vunpack.c.l.b16 %v465
        %v814 = vunpack.c.l.b16 %v466
        %v815 = vunpack.c.l.b16 %v467
        %v816 = vunpack.c.l.b16 %v468
        %v817 = vunpack.c.l.b16 %v469
        %v818 = vunpack.c.l.b16 %v470
        %v819 = vunpack.c.l.b16 %v471
        %v820 = vunpack.c.l.b16 %v472
        %v821 = vunpack.c.l.b16 %v473
        %v822 = vunpack.c.l.b16 %v474
        %v823 = vunpack.c.l.b16 %v475
        %v824 = vpack.c.b16 %v795, %v794
        %v825 = vpack.c.b16 %v797, %v796
        %v826 = vpack.c.b16 %v799, %v798
        %v827 = vpack.c.b16 %v801, %v800
        %v828 = vpack.c.b16 %v803, %v802
        %v829 = vpack.c.b16 %v805, %v804
        %v830 = vpack.c.b16 %v807, %v806
        %v831 = vpack.c.b16 %v809, %v808
        %v832 = vpack.c.b16 %v811, %v810
        %v833 = vpack.c.b16 %v813, %v812
        %v834 = vpack.c.b16 %v815, %v814
        %v835 = vpack.c.b16 %v817, %v816
        %v836 = vpack.c.b16 %v819, %v818
        %v837 = vpack.c.b16 %v821, %v820
        %v838 = vpack.c.b16 %v823, %v822
        %vm854 = vcmask 916480
        %v856 = vsel %vm854, %v669, 0
        %v859 = vsel %vm854, %v671, 0
        %v862 = vsel %vm854, %v673, 0
        %v865 = vsel %vm854, %v675, 0
        %v868 = vsel %vm854, %v677, 0
        %v871 = vsel %vm854, %v679, 0
        %v874 = vsel %vm854, %v681, 0
        %v877 = vsel %vm854, %v683, 0
        %v880 = vsel %vm854, %v685, 0
        %v883 = vsel %vm854, %v687, 0
        %v886 = vsel %vm854, %v689, 0
        %v889 = vsel %vm854, %v691, 0
        %v892 = vsel %vm854, %v693, 0
        %v895 = vsel %vm854, %v695, 0
        %v898 = vsel %vm854, %v697, 0
        %v901 = vsel %vm854, %v699, 0
        %v904 = vsel %vm854, %v701, 0
        %v907 = vsel %vm854, %v703, 0
        %v910 = vsel %vm854, %v705, 0
        %v913 = vsel %vm854, %v707, 0
        %v916 = vsel %vm854, %v709, 0
        %v919 = vsel %vm854, %v711, 0
        %v922 = vsel %vm854, %v713, 0
        %v925 = vsel %vm854, %v715, 0
        %v928 = vsel %vm854, %v717, 0
        %v931 = vsel %vm854, %v719, 0
        %v934 = vsel %vm854, %v721, 0
        %v937 = vsel %vm854, %v723, 0
        %v940 = vsel %vm854, %v725, 0
        %v943 = vsel %vm854, %v727, 0
        %v946 = vsel %vm854, %v729, 0
        %v949 = vsel %vm854, %v731, 0
        %951 = vmatprep.subr.bf16.mxu0 0
        %952 = vmatpush1.bf16.msra.mxu0 %v824
        %953 = vmatprep.subr.bf16.mxu0 0
        %954 = vmatpush1.bf16.msra.mxu0 %v825
        %955 = vmatprep.subr.bf16.mxu0 0
        %956 = vmatpush1.bf16.msra.mxu0 %v826
        %957 = vmatprep.subr.bf16.mxu0 0
        %958 = vmatpush1.bf16.msra.mxu0 %v827
        %959 = vmatprep.subr.bf16.mxu0 0
        %960 = vmatpush1.bf16.msra.mxu0 %v828
        %961 = vmatprep.subr.bf16.mxu0 0
        %962 = vmatpush1.bf16.msra.mxu0 %v829
        %963 = vmatprep.subr.bf16.mxu0 0
        %964 = vmatpush1.bf16.msra.mxu0 %v830
        %965 = vmatprep.subr.bf16.mxu0 0
        %966 = vmatpush1.bf16.msra.mxu0 %v831
        %967 = vmatprep.subr.bf16.mxu0 0
        %968 = vmatpush1.bf16.msra.mxu0 %v832
        %969 = vmatprep.subr.bf16.mxu0 0
        %970 = vmatpush1.bf16.msra.mxu0 %v833
        %971 = vmatprep.subr.bf16.mxu0 0
        %972 = vmatpush1.bf16.msra.mxu0 %v834
        %973 = vmatprep.subr.bf16.mxu0 0
        %974 = vmatpush1.bf16.msra.mxu0 %v835
        %975 = vmatprep.subr.bf16.mxu0 0
        %976 = vmatpush1.bf16.msra.mxu0 %v836
        %977 = vmatprep.subr.bf16.mxu0 0
        %978 = vmatpush1.bf16.msra.mxu0 %v837
        %979 = vmatprep.subr.bf16.mxu0 0
        %980 = vmatpush1.bf16.msra.mxu0 %v838
        %981 = vmatprep.subr.bf16.mxu0 0
        %982 = vmatpush1.bf16.msra.mxu0 0
        %983 = vmatprep.mubr.bf16.mxu0 %v856
        %984 = vmatmul.mubr.bf16.gmra.mrb[0].mxu0 %v668
        %v985 = vpop.f32.mrb[0].mxu0
        %v986 = vadd.f32 0.0, %v985
        %v987 = vpop.f32.mrb[0].mxu0
        %v988 = vpop.f32.mrb[0].mxu0
        %v989 = vadd.f32 0.0, %v988
        %v990 = vpop.f32.mrb[0].mxu0
        %991 = vmatprep.mubr.bf16.mxu0 %v859
        %992 = vmatmul.mubr.bf16.gmra.mrb[0].mxu0 %v670
        %v993 = vpop.f32.mrb[0].mxu0
        %v994 = vadd.f32 0.0, %v993
        %v995 = vpop.f32.mrb[0].mxu0
        %v996 = vpop.f32.mrb[0].mxu0
        %v997 = vadd.f32 0.0, %v996
        %v998 = vpop.f32.mrb[0].mxu0
        %999 = vmatprep.mubr.bf16.mxu0 %v862
        %1000 = vmatmul.mubr.bf16.gmra.mrb[0].mxu0 %v672
        %v1001 = vpop.f32.mrb[0].mxu0
        %v1002 = vadd.f32 0.0, %v1001
        %v1003 = vpop.f32.mrb[0].mxu0
        %v1004 = vpop.f32.mrb[0].mxu0
        %v1005 = vadd.f32 0.0, %v1004
        %v1006 = vpop.f32.mrb[0].mxu0
        %1007 = vmatprep.mubr.bf16.mxu0 %v865
        %1008 = vmatmul.mubr.bf16.gmra.mrb[0].mxu0 %v674
        %v1009 = vpop.f32.mrb[0].mxu0
        %v1010 = vadd.f32 0.0, %v1009
        %v1011 = vpop.f32.mrb[0].mxu0
        %v1012 = vpop.f32.mrb[0].mxu0
        %v1013 = vadd.f32 0.0, %v1012
        %v1014 = vpop.f32.mrb[0].mxu0
        %1015 = vmatprep.mubr.bf16.mxu0 %v868
        %1016 = vmatmul.mubr.bf16.gmra.mrb[0].mxu0 %v676
        %v1017 = vpop.f32.mrb[0].mxu0
        %v1018 = vadd.f32 0.0, %v1017
        %v1019 = vpop.f32.mrb[0].mxu0
        %v1020 = vpop.f32.mrb[0].mxu0
        %v1021 = vadd.f32 0.0, %v1020
        %v1022 = vpop.f32.mrb[0].mxu0
        %1023 = vmatprep.mubr.bf16.mxu0 %v871
        %1024 = vmatmul.mubr.bf16.gmra.mrb[0].mxu0 %v678
        %v1025 = vpop.f32.mrb[0].mxu0
        %v1026 = vadd.f32 0.0, %v1025
        %v1027 = vpop.f32.mrb[0].mxu0
        %v1028 = vpop.f32.mrb[0].mxu0
        %v1029 = vadd.f32 0.0, %v1028
        %v1030 = vpop.f32.mrb[0].mxu0
        %1031 = vmatprep.mubr.bf16.mxu0 %v874
        %1032 = vmatmul.mubr.bf16.gmra.mrb[0].mxu0 %v680
        %v1033 = vpop.f32.mrb[0].mxu0
        %v1034 = vadd.f32 0.0, %v1033
        %v1035 = vpop.f32.mrb[0].mxu0
        %v1036 = vpop.f32.mrb[0].mxu0
        %v1037 = vadd.f32 0.0, %v1036
        %v1038 = vpop.f32.mrb[0].mxu0
        %1039 = vmatprep.mubr.bf16.mxu0 %v877
        %1040 = vmatmul.mubr.bf16.gmra.mrb[0].mxu0 %v682
        %v1041 = vpop.f32.mrb[0].mxu0
        %v1042 = vadd.f32 0.0, %v1041
        %v1043 = vpop.f32.mrb[0].mxu0
        %v1044 = vpop.f32.mrb[0].mxu0
        %v1045 = vadd.f32 0.0, %v1044
        %v1046 = vpop.f32.mrb[0].mxu0
        %1047 = vmatprep.mubr.bf16.mxu0 %v880
        %1048 = vmatmul.mubr.bf16.gmra.mrb[0].mxu0 %v684
        %v1049 = vpop.f32.mrb[0].mxu0
        %v1050 = vadd.f32 0.0, %v1049
        %v1051 = vpop.f32.mrb[0].mxu0
        %v1052 = vpop.f32.mrb[0].mxu0
        %v1053 = vadd.f32 0.0, %v1052
        %v1054 = vpop.f32.mrb[0].mxu0
        %1055 = vmatprep.mubr.bf16.mxu0 %v883
        %1056 = vmatmul.mubr.bf16.gmra.mrb[0].mxu0 %v686
        %v1057 = vpop.f32.mrb[0].mxu0
        %v1058 = vadd.f32 0.0, %v1057
        %v1059 = vpop.f32.mrb[0].mxu0
        %v1060 = vpop.f32.mrb[0].mxu0
        %v1061 = vadd.f32 0.0, %v1060
        %v1062 = vpop.f32.mrb[0].mxu0
        %1063 = vmatprep.mubr.bf16.mxu0 %v886
        %1064 = vmatmul.mubr.bf16.gmra.mrb[0].mxu0 %v688
        %v1065 = vpop.f32.mrb[0].mxu0
        %v1066 = vadd.f32 0.0, %v1065
        %v1067 = vpop.f32.mrb[0].mxu0
        %v1068 = vpop.f32.mrb[0].mxu0
        %v1069 = vadd.f32 0.0, %v1068
        %v1070 = vpop.f32.mrb[0].mxu0
        %1071 = vmatprep.mubr.bf16.mxu0 %v889
        %1072 = vmatmul.mubr.bf16.gmra.mrb[0].mxu0 %v690
        %v1073 = vpop.f32.mrb[0].mxu0
        %v1074 = vadd.f32 0.0, %v1073
        %v1075 = vpop.f32.mrb[0].mxu0
        %v1076 = vpop.f32.mrb[0].mxu0
        %v1077 = vadd.f32 0.0, %v1076
        %v1078 = vpop.f32.mrb[0].mxu0
        %1079 = vmatprep.mubr.bf16.mxu0 %v892
        %1080 = vmatmul.mubr.bf16.gmra.mrb[0].mxu0 %v692
        %v1081 = vpop.f32.mrb[0].mxu0
        %v1082 = vadd.f32 0.0, %v1081
        %v1083 = vpop.f32.mrb[0].mxu0
        %v1084 = vpop.f32.mrb[0].mxu0
        %v1085 = vadd.f32 0.0, %v1084
        %v1086 = vpop.f32.mrb[0].mxu0
        %1087 = vmatprep.mubr.bf16.mxu0 %v895
        %1088 = vmatmul.mubr.bf16.gmra.mrb[0].mxu0 %v694
        %v1089 = vpop.f32.mrb[0].mxu0
        %v1090 = vadd.f32 0.0, %v1089
        %v1091 = vpop.f32.mrb[0].mxu0
        %v1092 = vpop.f32.mrb[0].mxu0
        %v1093 = vadd.f32 0.0, %v1092
        %v1094 = vpop.f32.mrb[0].mxu0
        %1095 = vmatprep.mubr.bf16.mxu0 %v898
        %1096 = vmatmul.mubr.bf16.gmra.mrb[0].mxu0 %v696
        %v1097 = vpop.f32.mrb[0].mxu0
        %v1098 = vadd.f32 0.0, %v1097
        %v1099 = vpop.f32.mrb[0].mxu0
        %v1100 = vpop.f32.mrb[0].mxu0
        %v1101 = vadd.f32 0.0, %v1100
        %v1102 = vpop.f32.mrb[0].mxu0
        %1103 = vmatprep.mubr.bf16.mxu0 %v901
        %1104 = vmatmul.mubr.bf16.gmra.mrb[0].mxu0 %v698
        %v1105 = vpop.f32.mrb[0].mxu0
        %v1106 = vadd.f32 0.0, %v1105
        %v1107 = vpop.f32.mrb[0].mxu0
        %v1108 = vpop.f32.mrb[0].mxu0
        %v1109 = vadd.f32 0.0, %v1108
        %v1110 = vpop.f32.mrb[0].mxu0
        %1111 = vmatprep.mubr.bf16.mxu0 %v904
        %1112 = vmatmul.mubr.bf16.gmra.mrb[0].mxu0 %v700
        %v1113 = vpop.f32.mrb[0].mxu0
        %v1114 = vadd.f32 0.0, %v1113
        %v1115 = vpop.f32.mrb[0].mxu0
        %v1116 = vpop.f32.mrb[0].mxu0
        %v1117 = vadd.f32 0.0, %v1116
        %v1118 = vpop.f32.mrb[0].mxu0
        %1119 = vmatprep.mubr.bf16.mxu0 %v907
        %1120 = vmatmul.mubr.bf16.gmra.mrb[0].mxu0 %v702
        %v1121 = vpop.f32.mrb[0].mxu0
        %v1122 = vadd.f32 0.0, %v1121
        %v1123 = vpop.f32.mrb[0].mxu0
        %v1124 = vpop.f32.mrb[0].mxu0
        %v1125 = vadd.f32 0.0, %v1124
        %v1126 = vpop.f32.mrb[0].mxu0
        %1127 = vmatprep.mubr.bf16.mxu0 %v910
        %1128 = vmatmul.mubr.bf16.gmra.mrb[0].mxu0 %v704
        %v1129 = vpop.f32.mrb[0].mxu0
        %v1130 = vadd.f32 0.0, %v1129
        %v1131 = vpop.f32.mrb[0].mxu0
        %v1132 = vpop.f32.mrb[0].mxu0
        %v1133 = vadd.f32 0.0, %v1132
        %v1134 = vpop.f32.mrb[0].mxu0
        %1135 = vmatprep.mubr.bf16.mxu0 %v913
        %1136 = vmatmul.mubr.bf16.gmra.mrb[0].mxu0 %v706
        %v1137 = vpop.f32.mrb[0].mxu0
        %v1138 = vadd.f32 0.0, %v1137
        %v1139 = vpop.f32.mrb[0].mxu0
        %v1140 = vpop.f32.mrb[0].mxu0
        %v1141 = vadd.f32 0.0, %v1140
        %v1142 = vpop.f32.mrb[0].mxu0
        %1143 = vmatprep.mubr.bf16.mxu0 %v916
        %1144 = vmatmul.mubr.bf16.gmra.mrb[0].mxu0 %v708
        %v1145 = vpop.f32.mrb[0].mxu0
        %v1146 = vadd.f32 0.0, %v1145
        %v1147 = vpop.f32.mrb[0].mxu0
        %v1148 = vpop.f32.mrb[0].mxu0
        %v1149 = vadd.f32 0.0, %v1148
        %v1150 = vpop.f32.mrb[0].mxu0
        %1151 = vmatprep.mubr.bf16.mxu0 %v919
        %1152 = vmatmul.mubr.bf16.gmra.mrb[0].mxu0 %v710
        %v1153 = vpop.f32.mrb[0].mxu0
        %v1154 = vadd.f32 0.0, %v1153
        %v1155 = vpop.f32.mrb[0].mxu0
        %v1156 = vpop.f32.mrb[0].mxu0
        %v1157 = vadd.f32 0.0, %v1156
        %v1158 = vpop.f32.mrb[0].mxu0
        %1159 = vmatprep.mubr.bf16.mxu0 %v922
        %1160 = vmatmul.mubr.bf16.gmra.mrb[0].mxu0 %v712
        %v1161 = vpop.f32.mrb[0].mxu0
        %v1162 = vadd.f32 0.0, %v1161
        %v1163 = vpop.f32.mrb[0].mxu0
        %v1164 = vpop.f32.mrb[0].mxu0
        %v1165 = vadd.f32 0.0, %v1164
        %v1166 = vpop.f32.mrb[0].mxu0
        %1167 = vmatprep.mubr.bf16.mxu0 %v925
        %1168 = vmatmul.mubr.bf16.gmra.mrb[0].mxu0 %v714
        %v1169 = vpop.f32.mrb[0].mxu0
        %v1170 = vadd.f32 0.0, %v1169
        %v1171 = vpop.f32.mrb[0].mxu0
        %v1172 = vpop.f32.mrb[0].mxu0
        %v1173 = vadd.f32 0.0, %v1172
        %v1174 = vpop.f32.mrb[0].mxu0
        %1175 = vmatprep.mubr.bf16.mxu0 %v928
        %1176 = vmatmul.mubr.bf16.gmra.mrb[0].mxu0 %v716
        %v1177 = vpop.f32.mrb[0].mxu0
        %v1178 = vadd.f32 0.0, %v1177
        %v1179 = vpop.f32.mrb[0].mxu0
        %v1180 = vpop.f32.mrb[0].mxu0
        %v1181 = vadd.f32 0.0, %v1180
        %v1182 = vpop.f32.mrb[0].mxu0
        %1183 = vmatprep.mubr.bf16.mxu0 %v931
        %1184 = vmatmul.mubr.bf16.gmra.mrb[0].mxu0 %v718
        %v1185 = vpop.f32.mrb[0].mxu0
        %v1186 = vadd.f32 0.0, %v1185
        %v1187 = vpop.f32.mrb[0].mxu0
        %v1188 = vpop.f32.mrb[0].mxu0
        %v1189 = vadd.f32 0.0, %v1188
        %v1190 = vpop.f32.mrb[0].mxu0
        %1191 = vmatprep.mubr.bf16.mxu0 %v934
        %1192 = vmatmul.mubr.bf16.gmra.mrb[0].mxu0 %v720
        %v1193 = vpop.f32.mrb[0].mxu0
        %v1194 = vadd.f32 0.0, %v1193
        %v1195 = vpop.f32.mrb[0].mxu0
        %v1196 = vpop.f32.mrb[0].mxu0
        %v1197 = vadd.f32 0.0, %v1196
        %v1198 = vpop.f32.mrb[0].mxu0
        %1199 = vmatprep.mubr.bf16.mxu0 %v937
        %1200 = vmatmul.mubr.bf16.gmra.mrb[0].mxu0 %v722
        %v1201 = vpop.f32.mrb[0].mxu0
        %v1202 = vadd.f32 0.0, %v1201
        %v1203 = vpop.f32.mrb[0].mxu0
        %v1204 = vpop.f32.mrb[0].mxu0
        %v1205 = vadd.f32 0.0, %v1204
        %v1206 = vpop.f32.mrb[0].mxu0
        %1207 = vmatprep.mubr.bf16.mxu0 %v940
        %1208 = vmatmul.mubr.bf16.gmra.mrb[0].mxu0 %v724
        %v1209 = vpop.f32.mrb[0].mxu0
        %v1210 = vadd.f32 0.0, %v1209
        %v1211 = vpop.f32.mrb[0].mxu0
        %v1212 = vpop.f32.mrb[0].mxu0
        %v1213 = vadd.f32 0.0, %v1212
        %v1214 = vpop.f32.mrb[0].mxu0
        %1215 = vmatprep.mubr.bf16.mxu0 %v943
        %1216 = vmatmul.mubr.bf16.gmra.mrb[0].mxu0 %v726
        %v1217 = vpop.f32.mrb[0].mxu0
        %v1218 = vadd.f32 0.0, %v1217
        %v1219 = vpop.f32.mrb[0].mxu0
        %v1220 = vpop.f32.mrb[0].mxu0
        %v1221 = vadd.f32 0.0, %v1220
        %v1222 = vpop.f32.mrb[0].mxu0
        %1223 = vmatprep.mubr.bf16.mxu0 %v946
        %1224 = vmatmul.mubr.bf16.gmra.mrb[0].mxu0 %v728
        %v1225 = vpop.f32.mrb[0].mxu0
        %v1226 = vadd.f32 0.0, %v1225
        %v1227 = vpop.f32.mrb[0].mxu0
        %v1228 = vpop.f32.mrb[0].mxu0
        %v1229 = vadd.f32 0.0, %v1228
        %v1230 = vpop.f32.mrb[0].mxu0
        %1231 = vmatprep.mubr.bf16.mxu0 %v949
        %1232 = vmatmul.mubr.bf16.gmra.mrb[0].mxu0 %v730
        %v1233 = vpop.f32.mrb[0].mxu0
        %v1234 = vadd.f32 0.0, %v1233
        %v1235 = vpop.f32.mrb[0].mxu0
        %v1236 = vpop.f32.mrb[0].mxu0
        %v1237 = vadd.f32 0.0, %v1236
        %v1238 = vpop.f32.mrb[0].mxu0
        %1239 = vdwg.mxu0
        %v1240 = vadd.f32 %v318, %v986
        %v1241 = vadd.f32 %v319, %v989
        %v1242 = vadd.f32 %v320, %v994
        %v1243 = vadd.f32 %v321, %v997
        %v1244 = vadd.f32 %v322, %v1002
        %v1245 = vadd.f32 %v323, %v1005
        %v1246 = vadd.f32 %v324, %v1010
        %v1247 = vadd.f32 %v325, %v1013
        %v1248 = vadd.f32 %v326, %v1018
        %v1249 = vadd.f32 %v327, %v1021
        %v1250 = vadd.f32 %v328, %v1026
        %v1251 = vadd.f32 %v329, %v1029
        %v1252 = vadd.f32 %v330, %v1034
        %v1253 = vadd.f32 %v331, %v1037
        %v1254 = vadd.f32 %v332, %v1042
        %v1255 = vadd.f32 %v333, %v1045
        %v1256 = vadd.f32 %v334, %v1050
        %v1257 = vadd.f32 %v335, %v1053
        %v1258 = vadd.f32 %v336, %v1058
        %v1259 = vadd.f32 %v337, %v1061
        %v1260 = vadd.f32 %v338, %v1066
        %v1261 = vadd.f32 %v339, %v1069
        %v1262 = vadd.f32 %v340, %v1074
        %v1263 = vadd.f32 %v341, %v1077
        %v1264 = vadd.f32 %v342, %v1082
        %v1265 = vadd.f32 %v343, %v1085
        %v1266 = vadd.f32 %v344, %v1090
        %v1267 = vadd.f32 %v345, %v1093
        %v1268 = vadd.f32 %v346, %v1098
        %v1269 = vadd.f32 %v347, %v1101
        %v1270 = vadd.f32 %v348, %v1106
        %v1271 = vadd.f32 %v349, %v1109
        %v1272 = vadd.f32 %v350, %v1114
        %v1273 = vadd.f32 %v351, %v1117
        %v1274 = vadd.f32 %v352, %v1122
        %v1275 = vadd.f32 %v353, %v1125
        %v1276 = vadd.f32 %v354, %v1130
        %v1277 = vadd.f32 %v355, %v1133
        %v1278 = vadd.f32 %v356, %v1138
        %v1279 = vadd.f32 %v357, %v1141
        %v1280 = vadd.f32 %v358, %v1146
        %v1281 = vadd.f32 %v359, %v1149
        %v1282 = vadd.f32 %v360, %v1154
        %v1283 = vadd.f32 %v361, %v1157
        %v1284 = vadd.f32 %v362, %v1162
        %v1285 = vadd.f32 %v363, %v1165
        %v1286 = vadd.f32 %v364, %v1170
        %v1287 = vadd.f32 %v365, %v1173
        %v1288 = vadd.f32 %v366, %v1178
        %v1289 = vadd.f32 %v367, %v1181
        %v1290 = vadd.f32 %v368, %v1186
        %v1291 = vadd.f32 %v369, %v1189
        %v1292 = vadd.f32 %v370, %v1194
        %v1293 = vadd.f32 %v371, %v1197
        %v1294 = vadd.f32 %v372, %v1202
        %v1295 = vadd.f32 %v373, %v1205
        %v1296 = vadd.f32 %v374, %v1210
        %v1297 = vadd.f32 %v375, %v1213
        %v1298 = vadd.f32 %v376, %v1218
        %v1299 = vadd.f32 %v377, %v1221
        %v1300 = vadd.f32 %v378, %v1226
        %v1301 = vadd.f32 %v379, %v1229
        %v1302 = vadd.f32 %v380, %v1234
        %v1303 = vadd.f32 %v381, %v1237
        %vm1304 = vcmask 130048
        %1305 = vst.msk [vmem:[#allocation2] sm:$0xff] %vm1304, %v1240
        %1306 = vst.msk [vmem:[#allocation2 + $0x8] sm:$0xff] %vm1304, %v1241
        %1307 = vst.msk [vmem:[#allocation2 + $0x10] sm:$0xff] %vm1304, %v1242
        %1308 = vst.msk [vmem:[#allocation2 + $0x18] sm:$0xff] %vm1304, %v1243
        %1309 = vst.msk [vmem:[#allocation2 + $0x20] sm:$0xff] %vm1304, %v1244
        %1310 = vst.msk [vmem:[#allocation2 + $0x28] sm:$0xff] %vm1304, %v1245
        %1311 = vst.msk [vmem:[#allocation2 + $0x30] sm:$0xff] %vm1304, %v1246
        %1312 = vst.msk [vmem:[#allocation2 + $0x38] sm:$0xff] %vm1304, %v1247
        %1313 = vst.msk [vmem:[#allocation2 + $0x40] sm:$0xff] %vm1304, %v1248
        %1314 = vst.msk [vmem:[#allocation2 + $0x48] sm:$0xff] %vm1304, %v1249
        %1315 = vst.msk [vmem:[#allocation2 + $0x50] sm:$0xff] %vm1304, %v1250
        %1316 = vst.msk [vmem:[#allocation2 + $0x58] sm:$0xff] %vm1304, %v1251
        %1317 = vst.msk [vmem:[#allocation2 + $0x60] sm:$0xff] %vm1304, %v1252
        %1318 = vst.msk [vmem:[#allocation2 + $0x68] sm:$0xff] %vm1304, %v1253
        %1319 = vst.msk [vmem:[#allocation2 + $0x70] sm:$0xff] %vm1304, %v1254
        %1320 = vst.msk [vmem:[#allocation2 + $0x78] sm:$0xff] %vm1304, %v1255
        %1321 = vst.msk [vmem:[#allocation2 + $0x80] sm:$0xff] %vm1304, %v1256
        %1322 = vst.msk [vmem:[#allocation2 + $0x88] sm:$0xff] %vm1304, %v1257
        %1323 = vst.msk [vmem:[#allocation2 + $0x90] sm:$0xff] %vm1304, %v1258
        %1324 = vst.msk [vmem:[#allocation2 + $0x98] sm:$0xff] %vm1304, %v1259
        %1325 = vst.msk [vmem:[#allocation2 + $0xa0] sm:$0xff] %vm1304, %v1260
        %1326 = vst.msk [vmem:[#allocation2 + $0xa8] sm:$0xff] %vm1304, %v1261
        %1327 = vst.msk [vmem:[#allocation2 + $0xb0] sm:$0xff] %vm1304, %v1262
        %1328 = vst.msk [vmem:[#allocation2 + $0xb8] sm:$0xff] %vm1304, %v1263
        %1329 = vst.msk [vmem:[#allocation2 + $0xc0] sm:$0xff] %vm1304, %v1264
        %1330 = vst.msk [vmem:[#allocation2 + $0xc8] sm:$0xff] %vm1304, %v1265
        %1331 = vst.msk [vmem:[#allocation2 + $0xd0] sm:$0xff] %vm1304, %v1266
        %1332 = vst.msk [vmem:[#allocation2 + $0xd8] sm:$0xff] %vm1304, %v1267
        %1333 = vst.msk [vmem:[#allocation2 + $0xe0] sm:$0xff] %vm1304, %v1268
        %1334 = vst.msk [vmem:[#allocation2 + $0xe8] sm:$0xff] %vm1304, %v1269
        %1335 = vst.msk [vmem:[#allocation2 + $0xf0] sm:$0xff] %vm1304, %v1270
        %1336 = vst.msk [vmem:[#allocation2 + $0xf8] sm:$0xff] %vm1304, %v1271
        %1337 = vst.msk [vmem:[#allocation2 + $0x100] sm:$0xff] %vm1304, %v1272
        %1338 = vst.msk [vmem:[#allocation2 + $0x108] sm:$0xff] %vm1304, %v1273
        %1339 = vst.msk [vmem:[#allocation2 + $0x110] sm:$0xff] %vm1304, %v1274
        %1340 = vst.msk [vmem:[#allocation2 + $0x118] sm:$0xff] %vm1304, %v1275
        %1341 = vst.msk [vmem:[#allocation2 + $0x120] sm:$0xff] %vm1304, %v1276
        %1342 = vst.msk [vmem:[#allocation2 + $0x128] sm:$0xff] %vm1304, %v1277
        %1343 = vst.msk [vmem:[#allocation2 + $0x130] sm:$0xff] %vm1304, %v1278
        %1344 = vst.msk [vmem:[#allocation2 + $0x138] sm:$0xff] %vm1304, %v1279
        %1345 = vst.msk [vmem:[#allocation2 + $0x140] sm:$0xff] %vm1304, %v1280
        %1346 = vst.msk [vmem:[#allocation2 + $0x148] sm:$0xff] %vm1304, %v1281
        %1347 = vst.msk [vmem:[#allocation2 + $0x150] sm:$0xff] %vm1304, %v1282
        %1348 = vst.msk [vmem:[#allocation2 + $0x158] sm:$0xff] %vm1304, %v1283
        %1349 = vst.msk [vmem:[#allocation2 + $0x160] sm:$0xff] %vm1304, %v1284
        %1350 = vst.msk [vmem:[#allocation2 + $0x168] sm:$0xff] %vm1304, %v1285
        %1351 = vst.msk [vmem:[#allocation2 + $0x170] sm:$0xff] %vm1304, %v1286
        %1352 = vst.msk [vmem:[#allocation2 + $0x178] sm:$0xff] %vm1304, %v1287
        %1353 = vst.msk [vmem:[#allocation2 + $0x180] sm:$0xff] %vm1304, %v1288
        %1354 = vst.msk [vmem:[#allocation2 + $0x188] sm:$0xff] %vm1304, %v1289
        %1355 = vst.msk [vmem:[#allocation2 + $0x190] sm:$0xff] %vm1304, %v1290
        %1356 = vst.msk [vmem:[#allocation2 + $0x198] sm:$0xff] %vm1304, %v1291
        %1357 = vst.msk [vmem:[#allocation2 + $0x1a0] sm:$0xff] %vm1304, %v1292
        %1358 = vst.msk [vmem:[#allocation2 + $0x1a8] sm:$0xff] %vm1304, %v1293
        %1359 = vst.msk [vmem:[#allocation2 + $0x1b0] sm:$0xff] %vm1304, %v1294
        %1360 = vst.msk [vmem:[#allocation2 + $0x1b8] sm:$0xff] %vm1304, %v1295
        %1361 = vst.msk [vmem:[#allocation2 + $0x1c0] sm:$0xff] %vm1304, %v1296
        %1362 = vst.msk [vmem:[#allocation2 + $0x1c8] sm:$0xff] %vm1304, %v1297
        %1363 = vst.msk [vmem:[#allocation2 + $0x1d0] sm:$0xff] %vm1304, %v1298
        %1364 = vst.msk [vmem:[#allocation2 + $0x1d8] sm:$0xff] %vm1304, %v1299
        %1365 = vst.msk [vmem:[#allocation2 + $0x1e0] sm:$0xff] %vm1304, %v1300
        %1366 = vst.msk [vmem:[#allocation2 + $0x1e8] sm:$0xff] %vm1304, %v1301
        %1367 = vst.msk [vmem:[#allocation2 + $0x1f0] sm:$0xff] %vm1304, %v1302
        %1368 = vst.msk [vmem:[#allocation2 + $0x1f8] sm:$0xff] %vm1304, %v1303
        // Predicated region
        $region41: #{_conv_fwd_jit.1} parent=35 // pred_check
          %p1369 = pneg %p249
        $region42: #{_conv_fwd_jit.1} parent=35 // pred_check_branch
          %1371 = sbr.rel (%p1369) target = $region44
        $region43: #{_conv_fwd_jit.1} parent=35 // pred_region
          %v1372 = vld [vmem:[#allocation2] sm:$0xff]
          %v1373 = vld [vmem:[#allocation2 + $0x8] sm:$0xff]
          %v1374 = vld [vmem:[#allocation2 + $0x10] sm:$0xff]
          %v1375 = vld [vmem:[#allocation2 + $0x18] sm:$0xff]
          %v1376 = vld [vmem:[#allocation2 + $0x20] sm:$0xff]
          %v1377 = vld [vmem:[#allocation2 + $0x28] sm:$0xff]
          %v1378 = vld [vmem:[#allocation2 + $0x30] sm:$0xff]
          %v1379 = vld [vmem:[#allocation2 + $0x38] sm:$0xff]
          %v1380 = vld [vmem:[#allocation2 + $0x40] sm:$0xff]
          %v1381 = vld [vmem:[#allocation2 + $0x48] sm:$0xff]
          %v1382 = vld [vmem:[#allocation2 + $0x50] sm:$0xff]
          %v1383 = vld [vmem:[#allocation2 + $0x58] sm:$0xff]
          %v1384 = vld [vmem:[#allocation2 + $0x60] sm:$0xff]
          %v1385 = vld [vmem:[#allocation2 + $0x68] sm:$0xff]
          %v1386 = vld [vmem:[#allocation2 + $0x70] sm:$0xff]
          %v1387 = vld [vmem:[#allocation2 + $0x78] sm:$0xff]
          %v1388 = vld [vmem:[#allocation2 + $0x80] sm:$0xff]
          %v1389 = vld [vmem:[#allocation2 + $0x88] sm:$0xff]
          %v1390 = vld [vmem:[#allocation2 + $0x90] sm:$0xff]
          %v1391 = vld [vmem:[#allocation2 + $0x98] sm:$0xff]
          %v1392 = vld [vmem:[#allocation2 + $0xa0] sm:$0xff]
          %v1393 = vld [vmem:[#allocation2 + $0xa8] sm:$0xff]
          %v1394 = vld [vmem:[#allocation2 + $0xb0] sm:$0xff]
          %v1395 = vld [vmem:[#allocation2 + $0xb8] sm:$0xff]
          %v1396 = vld [vmem:[#allocation2 + $0xc0] sm:$0xff]
          %v1397 = vld [vmem:[#allocation2 + $0xc8] sm:$0xff]
          %v1398 = vld [vmem:[#allocation2 + $0xd0] sm:$0xff]
          %v1399 = vld [vmem:[#allocation2 + $0xd8] sm:$0xff]
          %v1400 = vld [vmem:[#allocation2 + $0xe0] sm:$0xff]
          %v1401 = vld [vmem:[#allocation2 + $0xe8] sm:$0xff]
          %v1402 = vld [vmem:[#allocation2 + $0xf0] sm:$0xff]
          %v1403 = vld [vmem:[#allocation2 + $0xf8] sm:$0xff]
          %v1404 = vld [vmem:[#allocation2 + $0x100] sm:$0xff]
          %v1405 = vld [vmem:[#allocation2 + $0x108] sm:$0xff]
          %v1406 = vld [vmem:[#allocation2 + $0x110] sm:$0xff]
          %v1407 = vld [vmem:[#allocation2 + $0x118] sm:$0xff]
          %v1408 = vld [vmem:[#allocation2 + $0x120] sm:$0xff]
          %v1409 = vld [vmem:[#allocation2 + $0x128] sm:$0xff]
          %v1410 = vld [vmem:[#allocation2 + $0x130] sm:$0xff]
          %v1411 = vld [vmem:[#allocation2 + $0x138] sm:$0xff]
          %v1412 = vld [vmem:[#allocation2 + $0x140] sm:$0xff]
          %v1413 = vld [vmem:[#allocation2 + $0x148] sm:$0xff]
          %v1414 = vld [vmem:[#allocation2 + $0x150] sm:$0xff]
          %v1415 = vld [vmem:[#allocation2 + $0x158] sm:$0xff]
          %v1416 = vld [vmem:[#allocation2 + $0x160] sm:$0xff]
          %v1417 = vld [vmem:[#allocation2 + $0x168] sm:$0xff]
          %v1418 = vld [vmem:[#allocation2 + $0x170] sm:$0xff]
          %v1419 = vld [vmem:[#allocation2 + $0x178] sm:$0xff]
          %v1420 = vld [vmem:[#allocation2 + $0x180] sm:$0xff]
          %v1421 = vld [vmem:[#allocation2 + $0x188] sm:$0xff]
          %v1422 = vld [vmem:[#allocation2 + $0x190] sm:$0xff]
          %v1423 = vld [vmem:[#allocation2 + $0x198] sm:$0xff]
          %v1424 = vld [vmem:[#allocation2 + $0x1a0] sm:$0xff]
          %v1425 = vld [vmem:[#allocation2 + $0x1a8] sm:$0xff]
          %v1426 = vld [vmem:[#allocation2 + $0x1b0] sm:$0xff]
          %v1427 = vld [vmem:[#allocation2 + $0x1b8] sm:$0xff]
          %v1428 = vld [vmem:[#allocation2 + $0x1c0] sm:$0xff]
          %v1429 = vld [vmem:[#allocation2 + $0x1c8] sm:$0xff]
          %v1430 = vld [vmem:[#allocation2 + $0x1d0] sm:$0xff]
          %v1431 = vld [vmem:[#allocation2 + $0x1d8] sm:$0xff]
          %v1432 = vld [vmem:[#allocation2 + $0x1e0] sm:$0xff]
          %v1433 = vld [vmem:[#allocation2 + $0x1e8] sm:$0xff]
          %v1434 = vld [vmem:[#allocation2 + $0x1f0] sm:$0xff]
          %v1435 = vld [vmem:[#allocation2 + $0x1f8] sm:$0xff]
          %v1436 = vld [vmem:[%s2] sm:$0x1]
          %v1438 = vlaneseq
          %v1439 = vshrl.u32 %v1438, 7
          %v1440 = vsub.s32 0, %v1439
          %v1441 = vrot.slane %v1436, %v1440
          %v1443 = vmul.f32 %v1372, %v1441
          %v1444 = vmul.f32 %v1373, %v1441
          %v1445 = vmul.f32 %v1374, %v1441
          %v1446 = vmul.f32 %v1375, %v1441
          %v1447 = vmul.f32 %v1376, %v1441
          %v1448 = vmul.f32 %v1377, %v1441
          %v1449 = vmul.f32 %v1378, %v1441
          %v1450 = vmul.f32 %v1379, %v1441
          %v1451 = vmul.f32 %v1380, %v1441
          %v1452 = vmul.f32 %v1381, %v1441
          %v1453 = vmul.f32 %v1382, %v1441
          %v1454 = vmul.f32 %v1383, %v1441
          %v1455 = vmul.f32 %v1384, %v1441
          %v1456 = vmul.f32 %v1385, %v1441
          %v1457 = vmul.f32 %v1386, %v1441
          %v1458 = vmul.f32 %v1387, %v1441
          %v1459 = vmul.f32 %v1388, %v1441
          %v1460 = vmul.f32 %v1389, %v1441
          %v1461 = vmul.f32 %v1390, %v1441
          %v1462 = vmul.f32 %v1391, %v1441
          %v1463 = vmul.f32 %v1392, %v1441
          %v1464 = vmul.f32 %v1393, %v1441
          %v1465 = vmul.f32 %v1394, %v1441
          %v1466 = vmul.f32 %v1395, %v1441
          %v1467 = vmul.f32 %v1396, %v1441
          %v1468 = vmul.f32 %v1397, %v1441
          %v1469 = vmul.f32 %v1398, %v1441
          %v1470 = vmul.f32 %v1399, %v1441
          %v1471 = vmul.f32 %v1400, %v1441
          %v1472 = vmul.f32 %v1401, %v1441
          %v1473 = vmul.f32 %v1402, %v1441
          %v1474 = vmul.f32 %v1403, %v1441
          %v1475 = vmul.f32 %v1404, %v1441
          %v1476 = vmul.f32 %v1405, %v1441
          %v1477 = vmul.f32 %v1406, %v1441
          %v1478 = vmul.f32 %v1407, %v1441
          %v1479 = vmul.f32 %v1408, %v1441
          %v1480 = vmul.f32 %v1409, %v1441
          %v1481 = vmul.f32 %v1410, %v1441
          %v1482 = vmul.f32 %v1411, %v1441
          %v1483 = vmul.f32 %v1412, %v1441
          %v1484 = vmul.f32 %v1413, %v1441
          %v1485 = vmul.f32 %v1414, %v1441
          %v1486 = vmul.f32 %v1415, %v1441
          %v1487 = vmul.f32 %v1416, %v1441
          %v1488 = vmul.f32 %v1417, %v1441
          %v1489 = vmul.f32 %v1418, %v1441
          %v1490 = vmul.f32 %v1419, %v1441
          %v1491 = vmul.f32 %v1420, %v1441
          %v1492 = vmul.f32 %v1421, %v1441
          %v1493 = vmul.f32 %v1422, %v1441
          %v1494 = vmul.f32 %v1423, %v1441
          %v1495 = vmul.f32 %v1424, %v1441
          %v1496 = vmul.f32 %v1425, %v1441
          %v1497 = vmul.f32 %v1426, %v1441
          %v1498 = vmul.f32 %v1427, %v1441
          %v1499 = vmul.f32 %v1428, %v1441
          %v1500 = vmul.f32 %v1429, %v1441
          %v1501 = vmul.f32 %v1430, %v1441
          %v1502 = vmul.f32 %v1431, %v1441
          %v1503 = vmul.f32 %v1432, %v1441
          %v1504 = vmul.f32 %v1433, %v1441
          %v1505 = vmul.f32 %v1434, %v1441
          %v1506 = vmul.f32 %v1435, %v1441
          %v1507 = vld [vmem:[%s3] sm:$0x1]
          %v1509 = vlaneseq
          %v1510 = vshrl.u32 %v1509, 7
          %v1511 = vsub.s32 0, %v1510
          %v1512 = vrot.slane %v1507, %v1511
          %v1514 = vadd.f32 %v1443, %v1512
          %v1515 = vadd.f32 %v1444, %v1512
          %v1516 = vadd.f32 %v1445, %v1512
          %v1517 = vadd.f32 %v1446, %v1512
          %v1518 = vadd.f32 %v1447, %v1512
          %v1519 = vadd.f32 %v1448, %v1512
          %v1520 = vadd.f32 %v1449, %v1512
          %v1521 = vadd.f32 %v1450, %v1512
          %v1522 = vadd.f32 %v1451, %v1512
          %v1523 = vadd.f32 %v1452, %v1512
          %v1524 = vadd.f32 %v1453, %v1512
          %v1525 = vadd.f32 %v1454, %v1512
          %v1526 = vadd.f32 %v1455, %v1512
          %v1527 = vadd.f32 %v1456, %v1512
          %v1528 = vadd.f32 %v1457, %v1512
          %v1529 = vadd.f32 %v1458, %v1512
          %v1530 = vadd.f32 %v1459, %v1512
          %v1531 = vadd.f32 %v1460, %v1512
          %v1532 = vadd.f32 %v1461, %v1512
          %v1533 = vadd.f32 %v1462, %v1512
          %v1534 = vadd.f32 %v1463, %v1512
          %v1535 = vadd.f32 %v1464, %v1512
          %v1536 = vadd.f32 %v1465, %v1512
          %v1537 = vadd.f32 %v1466, %v1512
          %v1538 = vadd.f32 %v1467, %v1512
          %v1539 = vadd.f32 %v1468, %v1512
          %v1540 = vadd.f32 %v1469, %v1512
          %v1541 = vadd.f32 %v1470, %v1512
          %v1542 = vadd.f32 %v1471, %v1512
          %v1543 = vadd.f32 %v1472, %v1512
          %v1544 = vadd.f32 %v1473, %v1512
          %v1545 = vadd.f32 %v1474, %v1512
          %v1546 = vadd.f32 %v1475, %v1512
          %v1547 = vadd.f32 %v1476, %v1512
          %v1548 = vadd.f32 %v1477, %v1512
          %v1549 = vadd.f32 %v1478, %v1512
          %v1550 = vadd.f32 %v1479, %v1512
          %v1551 = vadd.f32 %v1480, %v1512
          %v1552 = vadd.f32 %v1481, %v1512
          %v1553 = vadd.f32 %v1482, %v1512
          %v1554 = vadd.f32 %v1483, %v1512
          %v1555 = vadd.f32 %v1484, %v1512
          %v1556 = vadd.f32 %v1485, %v1512
          %v1557 = vadd.f32 %v1486, %v1512
          %v1558 = vadd.f32 %v1487, %v1512
          %v1559 = vadd.f32 %v1488, %v1512
          %v1560 = vadd.f32 %v1489, %v1512
          %v1561 = vadd.f32 %v1490, %v1512
          %v1562 = vadd.f32 %v1491, %v1512
          %v1563 = vadd.f32 %v1492, %v1512
          %v1564 = vadd.f32 %v1493, %v1512
          %v1565 = vadd.f32 %v1494, %v1512
          %v1566 = vadd.f32 %v1495, %v1512
          %v1567 = vadd.f32 %v1496, %v1512
          %v1568 = vadd.f32 %v1497, %v1512
          %v1569 = vadd.f32 %v1498, %v1512
          %v1570 = vadd.f32 %v1499, %v1512
          %v1571 = vadd.f32 %v1500, %v1512
          %v1572 = vadd.f32 %v1501, %v1512
          %v1573 = vadd.f32 %v1502, %v1512
          %v1574 = vadd.f32 %v1503, %v1512
          %v1575 = vadd.f32 %v1504, %v1512
          %v1576 = vadd.f32 %v1505, %v1512
          %v1577 = vadd.f32 %v1506, %v1512
          %v1578 = vmax.f32 %v1514, 0.0
          %v1579 = vmax.f32 %v1515, 0.0
          %v1580 = vmax.f32 %v1516, 0.0
          %v1581 = vmax.f32 %v1517, 0.0
          %v1582 = vmax.f32 %v1518, 0.0
          %v1583 = vmax.f32 %v1519, 0.0
          %v1584 = vmax.f32 %v1520, 0.0
          %v1585 = vmax.f32 %v1521, 0.0
          %v1586 = vmax.f32 %v1522, 0.0
          %v1587 = vmax.f32 %v1523, 0.0
          %v1588 = vmax.f32 %v1524, 0.0
          %v1589 = vmax.f32 %v1525, 0.0
          %v1590 = vmax.f32 %v1526, 0.0
          %v1591 = vmax.f32 %v1527, 0.0
          %v1592 = vmax.f32 %v1528, 0.0
          %v1593 = vmax.f32 %v1529, 0.0
          %v1594 = vmax.f32 %v1530, 0.0
          %v1595 = vmax.f32 %v1531, 0.0
          %v1596 = vmax.f32 %v1532, 0.0
          %v1597 = vmax.f32 %v1533, 0.0
          %v1598 = vmax.f32 %v1534, 0.0
          %v1599 = vmax.f32 %v1535, 0.0
          %v1600 = vmax.f32 %v1536, 0.0
          %v1601 = vmax.f32 %v1537, 0.0
          %v1602 = vmax.f32 %v1538, 0.0
          %v1603 = vmax.f32 %v1539, 0.0
          %v1604 = vmax.f32 %v1540, 0.0
          %v1605 = vmax.f32 %v1541, 0.0
          %v1606 = vmax.f32 %v1542, 0.0
          %v1607 = vmax.f32 %v1543, 0.0
          %v1608 = vmax.f32 %v1544, 0.0
          %v1609 = vmax.f32 %v1545, 0.0
          %v1610 = vmax.f32 %v1546, 0.0
          %v1611 = vmax.f32 %v1547, 0.0
          %v1612 = vmax.f32 %v1548, 0.0
          %v1613 = vmax.f32 %v1549, 0.0
          %v1614 = vmax.f32 %v1550, 0.0
          %v1615 = vmax.f32 %v1551, 0.0
          %v1616 = vmax.f32 %v1552, 0.0
          %v1617 = vmax.f32 %v1553, 0.0
          %v1618 = vmax.f32 %v1554, 0.0
          %v1619 = vmax.f32 %v1555, 0.0
          %v1620 = vmax.f32 %v1556, 0.0
          %v1621 = vmax.f32 %v1557, 0.0
          %v1622 = vmax.f32 %v1558, 0.0
          %v1623 = vmax.f32 %v1559, 0.0
          %v1624 = vmax.f32 %v1560, 0.0
          %v1625 = vmax.f32 %v1561, 0.0
          %v1626 = vmax.f32 %v1562, 0.0
          %v1627 = vmax.f32 %v1563, 0.0
          %v1628 = vmax.f32 %v1564, 0.0
          %v1629 = vmax.f32 %v1565, 0.0
          %v1630 = vmax.f32 %v1566, 0.0
          %v1631 = vmax.f32 %v1567, 0.0
          %v1632 = vmax.f32 %v1568, 0.0
          %v1633 = vmax.f32 %v1569, 0.0
          %v1634 = vmax.f32 %v1570, 0.0
          %v1635 = vmax.f32 %v1571, 0.0
          %v1636 = vmax.f32 %v1572, 0.0
          %v1637 = vmax.f32 %v1573, 0.0
          %v1638 = vmax.f32 %v1574, 0.0
          %v1639 = vmax.f32 %v1575, 0.0
          %v1640 = vmax.f32 %v1576, 0.0
          %v1641 = vmax.f32 %v1577, 0.0
          %1642 = vst.msk [vmem:[%s230] sm:$0xff] %vm1304, %v1578
          %1643 = vst.msk [vmem:[%s230 + $0x8] sm:$0xff] %vm1304, %v1579
          %1644 = vst.msk [vmem:[%s230 + $0x10] sm:$0xff] %vm1304, %v1580
          %1645 = vst.msk [vmem:[%s230 + $0x18] sm:$0xff] %vm1304, %v1581
          %1646 = vst.msk [vmem:[%s230 + $0x20] sm:$0xff] %vm1304, %v1582
          %1647 = vst.msk [vmem:[%s230 + $0x28] sm:$0xff] %vm1304, %v1583
          %1648 = vst.msk [vmem:[%s230 + $0x30] sm:$0xff] %vm1304, %v1584
          %1649 = vst.msk [vmem:[%s230 + $0x38] sm:$0xff] %vm1304, %v1585
          %1650 = vst.msk [vmem:[%s230 + $0x40] sm:$0xff] %vm1304, %v1586
          %1651 = vst.msk [vmem:[%s230 + $0x48] sm:$0xff] %vm1304, %v1587
          %1652 = vst.msk [vmem:[%s230 + $0x50] sm:$0xff] %vm1304, %v1588
          %1653 = vst.msk [vmem:[%s230 + $0x58] sm:$0xff] %vm1304, %v1589
          %1654 = vst.msk [vmem:[%s230 + $0x60] sm:$0xff] %vm1304, %v1590
          %1655 = vst.msk [vmem:[%s230 + $0x68] sm:$0xff] %vm1304, %v1591
          %1656 = vst.msk [vmem:[%s230 + $0x70] sm:$0xff] %vm1304, %v1592
          %1657 = vst.msk [vmem:[%s230 + $0x78] sm:$0xff] %vm1304, %v1593
          %1658 = vst.msk [vmem:[%s230 + $0x80] sm:$0xff] %vm1304, %v1594
          %1659 = vst.msk [vmem:[%s230 + $0x88] sm:$0xff] %vm1304, %v1595
          %1660 = vst.msk [vmem:[%s230 + $0x90] sm:$0xff] %vm1304, %v1596
          %1661 = vst.msk [vmem:[%s230 + $0x98] sm:$0xff] %vm1304, %v1597
          %1662 = vst.msk [vmem:[%s230 + $0xa0] sm:$0xff] %vm1304, %v1598
          %1663 = vst.msk [vmem:[%s230 + $0xa8] sm:$0xff] %vm1304, %v1599
          %1664 = vst.msk [vmem:[%s230 + $0xb0] sm:$0xff] %vm1304, %v1600
          %1665 = vst.msk [vmem:[%s230 + $0xb8] sm:$0xff] %vm1304, %v1601
          %1666 = vst.msk [vmem:[%s230 + $0xc0] sm:$0xff] %vm1304, %v1602
          %1667 = vst.msk [vmem:[%s230 + $0xc8] sm:$0xff] %vm1304, %v1603
          %1668 = vst.msk [vmem:[%s230 + $0xd0] sm:$0xff] %vm1304, %v1604
          %1669 = vst.msk [vmem:[%s230 + $0xd8] sm:$0xff] %vm1304, %v1605
          %1670 = vst.msk [vmem:[%s230 + $0xe0] sm:$0xff] %vm1304, %v1606
          %1671 = vst.msk [vmem:[%s230 + $0xe8] sm:$0xff] %vm1304, %v1607
          %1672 = vst.msk [vmem:[%s230 + $0xf0] sm:$0xff] %vm1304, %v1608
          %1673 = vst.msk [vmem:[%s230 + $0xf8] sm:$0xff] %vm1304, %v1609
          %1674 = vst.msk [vmem:[%s230 + $0x100] sm:$0xff] %vm1304, %v1610
          %1675 = vst.msk [vmem:[%s230 + $0x108] sm:$0xff] %vm1304, %v1611
          %1676 = vst.msk [vmem:[%s230 + $0x110] sm:$0xff] %vm1304, %v1612
          %1677 = vst.msk [vmem:[%s230 + $0x118] sm:$0xff] %vm1304, %v1613
          %1678 = vst.msk [vmem:[%s230 + $0x120] sm:$0xff] %vm1304, %v1614
          %1679 = vst.msk [vmem:[%s230 + $0x128] sm:$0xff] %vm1304, %v1615
          %1680 = vst.msk [vmem:[%s230 + $0x130] sm:$0xff] %vm1304, %v1616
          %1681 = vst.msk [vmem:[%s230 + $0x138] sm:$0xff] %vm1304, %v1617
          %1682 = vst.msk [vmem:[%s230 + $0x140] sm:$0xff] %vm1304, %v1618
          %1683 = vst.msk [vmem:[%s230 + $0x148] sm:$0xff] %vm1304, %v1619
          %1684 = vst.msk [vmem:[%s230 + $0x150] sm:$0xff] %vm1304, %v1620
          %1685 = vst.msk [vmem:[%s230 + $0x158] sm:$0xff] %vm1304, %v1621
          %1686 = vst.msk [vmem:[%s230 + $0x160] sm:$0xff] %vm1304, %v1622
          %1687 = vst.msk [vmem:[%s230 + $0x168] sm:$0xff] %vm1304, %v1623
          %1688 = vst.msk [vmem:[%s230 + $0x170] sm:$0xff] %vm1304, %v1624
          %1689 = vst.msk [vmem:[%s230 + $0x178] sm:$0xff] %vm1304, %v1625
          %1690 = vst.msk [vmem:[%s230 + $0x180] sm:$0xff] %vm1304, %v1626
          %1691 = vst.msk [vmem:[%s230 + $0x188] sm:$0xff] %vm1304, %v1627
          %1692 = vst.msk [vmem:[%s230 + $0x190] sm:$0xff] %vm1304, %v1628
          %1693 = vst.msk [vmem:[%s230 + $0x198] sm:$0xff] %vm1304, %v1629
          %1694 = vst.msk [vmem:[%s230 + $0x1a0] sm:$0xff] %vm1304, %v1630
          %1695 = vst.msk [vmem:[%s230 + $0x1a8] sm:$0xff] %vm1304, %v1631
          %1696 = vst.msk [vmem:[%s230 + $0x1b0] sm:$0xff] %vm1304, %v1632
          %1697 = vst.msk [vmem:[%s230 + $0x1b8] sm:$0xff] %vm1304, %v1633
          %1698 = vst.msk [vmem:[%s230 + $0x1c0] sm:$0xff] %vm1304, %v1634
          %1699 = vst.msk [vmem:[%s230 + $0x1c8] sm:$0xff] %vm1304, %v1635
          %1700 = vst.msk [vmem:[%s230 + $0x1d0] sm:$0xff] %vm1304, %v1636
          %1701 = vst.msk [vmem:[%s230 + $0x1d8] sm:$0xff] %vm1304, %v1637
          %1702 = vst.msk [vmem:[%s230 + $0x1e0] sm:$0xff] %vm1304, %v1638
          %1703 = vst.msk [vmem:[%s230 + $0x1e8] sm:$0xff] %vm1304, %v1639
          %1704 = vst.msk [vmem:[%s230 + $0x1f0] sm:$0xff] %vm1304, %v1640
          %1705 = vst.msk [vmem:[%s230 + $0x1f8] sm:$0xff] %vm1304, %v1641
        $region44: #{_conv_fwd_jit.1} parent=35 // pred_fallthru
          _
        %s1706 = sand.u32 %s134, 1
        %s1707 = scalar_lea.sflag [#allocation4], %s1706
        %s1708 = sand.u32 %s134, 1
        %s1709 = smul.addr %s1708, 512
        %s1710 = scalar_lea.vmem [#allocation3], %s1709
        // Predicated region
        $region45: #{_conv_fwd_jit.1} parent=35 // pred_check
          %p1711 = pneg %p144
        $region46: #{_conv_fwd_jit.1} parent=35 // pred_check_branch
          %1713 = sbr.rel (%p1711) target = $region48
        $region47: #{_conv_fwd_jit.1} parent=35 // pred_region
          %s1714 = smul.u32 64, %s22
          %s1716 = ssub.s32 8192, 8192
          %1717 = vsyncadd %s1707, %s1716
          %s1718 = smul.addr %s1714, 128
          %s1719 = scalar_lea.hbm %s4, %s1718
          %s1720 = sshll.u32 %s1710, 4
          %s1721 = int_to_ptr.vmem [resolvable:$true] %s1720
          %1726 = dma.vmem_to_hbm [thread:$0]  %s1721, 8192, %s1719, %s1707, 128, 128, 8
        $region48: #{_conv_fwd_jit.1} parent=35 // pred_fallthru
          _
      $region36: #{_conv_fwd_jit.1} parent=5 // pred_fallthru
        _
      %p1727 = scmp.le.s32.totalorder 2, %s13
      // Predicated region
      $region49: #{_conv_fwd_jit.1} parent=5 // pred_check
        %p1728 = pneg %p1727
      $region50: #{_conv_fwd_jit.1} parent=5 // pred_check_branch
        %1730 = sbr.rel (%p1728) target = $region52
      $region51: #{_conv_fwd_jit.1} parent=5 // pred_region
        %s1731 = ssub.s32 %s13, 2
        // Predicated region
        $region53: #{_conv_fwd_jit.1} parent=51 // pred_check
          %p1732 = pneg %p150
        $region54: #{_conv_fwd_jit.1} parent=51 // pred_check_branch
          %1734 = sbr.rel (%p1732) target = $region56
        $region55: #{_conv_fwd_jit.1} parent=51 // pred_region
          %s1735 = sand.u32 %s135, 1
          %s1736 = scalar_lea.sflag [#allocation4], %s1735
          %s1737 = sand.u32 %s135, 1
          %s1738 = smul.addr %s1737, 512
          %s1739 = scalar_lea.vmem [#allocation3], %s1738
          %1740 = dma.done %s1736, 8192
        $region56: #{_conv_fwd_jit.1} parent=51 // pred_fallthru
          _
      $region52: #{_conv_fwd_jit.1} parent=5 // pred_fallthru
        _
    $region6: #{_conv_fwd_jit.1} parent=1 // loop_footer
      %s17 = sadd.s32 1, %s13
    $region7: #{_conv_fwd_jit.1} parent=1 // loop_footer_branch
      %12 = sbr.rel target = $region3
    $region8: #{_conv_fwd_jit.1} parent=1 // loop_exit
      _
    %1741 = vsyncpa [#allocation4], 1
    %s1742 = scalar_lea.sflag [#allocation4], 1
    %1743 = vsyncpa %s1742, 1

</llo_original>
